<compile_context>
chip_gen: v5e
topology: v5e:2x2
jax: 0.10.0
libtpu: 0.0.40
codegen_flags: <defaults>
</compile_context>

<pallas_src>
import functools

import numpy as np
import jax
import jax.numpy as jnp
from jax import lax
from jax.experimental import pallas as pl
from jax.experimental.pallas import tpu as pltpu


def _gnn_stage_kernel(a_in, w_ref, x_hbm, o_ref, *scratch, mm_dtype, resident_a):
    """Grid = (layers, row_tiles).

    a_in    : resident_a -> (Np, Np) HBM ref (pl.ANY);  else (tr, Np) streamed tile
    w_ref   : (Dp, Dp)  this layer's padded weight (leading layer dim squeezed)
    x_hbm   : (Np, Dp)  padded input node features, HBM ref (pl.ANY), read once
    o_ref   : (tr, Dp)  output row tile (only written at the final layer)
    scratch : [a_vmem]  (Np, Np) resident adjacency   (resident_a only)
              x_state   (Np, Dp) f32 resident node-feature state
              xw_ref    (Np, Dp) mm_dtype, resident X @ W_l for this layer
              dma_sems  (2,) DMA semaphores
    """
    if resident_a:
        a_vmem, x_state, xw_ref, dma_sems = scratch
    else:
        x_state, xw_ref, dma_sems = scratch

    layer = pl.program_id(0)
    r = pl.program_id(1)
    n_layers = pl.num_programs(0)
    tr = o_ref.shape[0]

    # One-time initialization: pull x (and, if it fits, the whole adjacency)
    # from HBM into resident VMEM scratch.
    @pl.when((layer == 0) & (r == 0))
    def _():
        cp_x = pltpu.make_async_copy(x_hbm, x_state, dma_sems.at[0])
        cp_x.start()
        if resident_a:
            cp_a = pltpu.make_async_copy(a_in, a_vmem, dma_sems.at[1])
            cp_a.start()
        cp_x.wait()
        if resident_a:
            cp_a.wait()

    # Once per layer: XW = X_state @ W_l, materialized in mm_dtype so the
    # per-row-tile matmul below needs no re-cast of the full (Np, Dp) scratch.
    # Row updates below only overwrite x_state AFTER XW is materialized, so the
    # in-place state update is safe.
    @pl.when(r == 0)
    def _():
        xw_ref[...] = jnp.dot(
            x_state[...].astype(mm_dtype),
            w_ref[...].astype(mm_dtype),
            preferred_element_type=jnp.float32,
        ).astype(xw_ref.dtype)

    row0 = pl.multiple_of(r * tr, tr)
    x_rows = x_state[pl.ds(row0, tr), :]                       # (tr, Dp) f32

    if resident_a:
        a_tile = a_vmem[pl.ds(row0, tr), :]                    # (tr, Np) resident
    else:
        a_tile = a_in[...]                                     # (tr, Np) streamed

    # Message passing for this row tile: A_hat[rows, :] @ (X W_l), f32 accumulate.
    h = jnp.dot(a_tile.astype(mm_dtype), xw_ref[...],
                preferred_element_type=jnp.float32)
    h = jnp.maximum(h, 0.0)                                    # ReLU (GeneralLayer act)
    new_rows = x_rows + h                                      # skipsum residual (f32)
    x_state[pl.ds(row0, tr), :] = new_rows

    # Final l2 normalization (cfg.gnn.l2norm): F.normalize(p=2, dim=-1).
    # sumsq -> rsqrt (EUP) -> multiply; max(||x||, 1e-12) == rsqrt(max(sumsq, 1e-24)).
    # (rsqrt is the EUP approximation; differs from sqrt+div by a few ULPs.)
    # Intermediate layers never touch o_ref: their output block index is pinned
    # to (0, 0) by the index_map, so no dead HBM writeback is generated.
    @pl.when(layer == n_layers - 1)
    def _():
        sumsq = jnp.sum(new_rows * new_rows, axis=-1, keepdims=True)
        inv = lax.rsqrt(jnp.maximum(sumsq, 1e-24))
        o_ref[...] = new_rows * inv


def _round_up(x, m):
    return (x + m - 1) // m * m


def _pick_row_tile(n_pad, max_tile):
    """Largest row tile <= max_tile that divides n_pad and is a multiple of 16."""
    t = min(max_tile, n_pad)
    t -= t % 16
    while t >= 16:
        if n_pad % t == 0:
            return t
        t -= 16
    return n_pad


def gnn_standard_stage(a_norm, weights, x, *, row_tile=256,
                       matmul_dtype=jnp.bfloat16, a_dtype=jnp.bfloat16,
                       force_stream_a=False):
    """a_norm: [N, N] normalized adjacency, weights: [L, D, D], x: [N, D]."""
    L, D, D2 = weights.shape
    assert D == D2, "skipsum stage requires dim_in == dim_out"
    N = x.shape[0]

    # Lane-dense padded feature width and padded node count. Padded lanes/rows
    # are zero everywhere and stay zero through matmul / ReLU / residual /
    # l2-norm, so the leading (N, D) slice of the padded result is unchanged.
    Dp = _round_up(max(D, 1), 128)
    Np = _round_up(max(N, 1), 128)
    tr = _pick_row_tile(Np, row_tile)

    x_p = jnp.pad(x.astype(jnp.float32), ((0, Np - N), (0, Dp - D)))
    w_p = jnp.pad(weights.astype(jnp.float32),
                  ((0, 0), (0, Dp - D), (0, Dp - D)))
    a_p = jnp.pad(a_norm.astype(jnp.float32),
                  ((0, Np - N), (0, Np - N))).astype(a_dtype)

    mm_isz = jnp.dtype(matmul_dtype).itemsize
    a_isz = jnp.dtype(a_dtype).itemsize

    # Per-generation VMEM budget (v5e/v6e: 128 MiB, v7x: 64 MiB per core),
    # with ~20% headroom for Mosaic internal scratch.
    try:
        vmem_cap = int(pltpu.get_tpu_info().vmem_capacity_bytes)
    except Exception:
        vmem_cap = 64 * 1024 * 1024          # conservative fallback (v7x-sized)
    usable = int(0.80 * vmem_cap)

    state_bytes = Np * Dp * 4 + Np * Dp * mm_isz          # x_state + XW scratch
    block_bytes = 2 * Dp * Dp * 4 + 2 * tr * Dp * 4       # W + out blocks (double-buffered)
    resident_need = Np * Np * a_isz + state_bytes + block_bytes
    use_resident = (not force_stream_a) and (resident_need + (2 << 20) <= usable)

    if use_resident:
        need = resident_need
        a_spec = pl.BlockSpec(memory_space=pl.ANY)         # raw HBM ref, DMA'd once
        scratch = [
            pltpu.VMEM((Np, Np), a_dtype),                 # resident adjacency
            pltpu.VMEM((Np, Dp), jnp.float32),             # resident node-feature state
            pltpu.VMEM((Np, Dp), matmul_dtype),            # resident X @ W_l
            pltpu.SemaphoreType.DMA((2,)),
        ]
    else:
        # Streaming fallback for graphs whose adjacency does not fit VMEM:
        # shrink the row tile until the double-buffered (tr, Np) A stream fits.
        while tr > 16 and 2 * tr * Np * a_isz + state_bytes + block_bytes > usable:
            tr = _pick_row_tile(Np, tr - 16)
        block_bytes = 2 * Dp * Dp * 4 + 2 * tr * Dp * 4
        need = 2 * tr * Np * a_isz + state_bytes + block_bytes
        a_spec = pl.BlockSpec((tr, Np), lambda l, r: (r, 0))
        scratch = [
            pltpu.VMEM((Np, Dp), jnp.float32),
            pltpu.VMEM((Np, Dp), matmul_dtype),
            pltpu.SemaphoreType.DMA((2,)),
        ]

    n_row_tiles = Np // tr
    vmem_limit = int(min(usable, max(need + (4 << 20), 32 * 1024 * 1024)))

    kernel = functools.partial(_gnn_stage_kernel, mm_dtype=matmul_dtype,
                               resident_a=use_resident)
    n_layers = L

    out_padded = pl.pallas_call(
        kernel,
        out_shape=jax.ShapeDtypeStruct((Np, Dp), jnp.float32),
        grid_spec=pltpu.PrefetchScalarGridSpec(
            num_scalar_prefetch=0,
            grid=(L, n_row_tiles),
            in_specs=[
                a_spec,                                               # adjacency
                pl.BlockSpec((None, Dp, Dp), lambda l, r: (l, 0, 0)), # layer weight
                pl.BlockSpec(memory_space=pl.ANY),                    # input features
            ],
            # Intermediate layers are pinned to output block (0, 0) (never
            # written); only the final layer writes real blocks back to HBM.
            out_specs=pl.BlockSpec(
                (tr, Dp),
                lambda l, r: (jnp.where(l == n_layers - 1, r, 0), 0)),
            scratch_shapes=scratch,
        ),
        compiler_params=pltpu.CompilerParams(
            dimension_semantics=("arbitrary", "arbitrary"),
            vmem_limit_bytes=vmem_limit,
        ),
    )(a_p, w_p, x_p)

    return out_padded[:N, :D]


def reference(a_norm, weights, x):
    """Pure-JAX reference of the same forward pass."""
    h = x
    for l in range(weights.shape[0]):
        hl = jnp.maximum(a_norm @ (h @ weights[l]), 0.0)
        h = h + hl
    nrm = jnp.sqrt(jnp.sum(h * h, axis=-1, keepdims=True))
    return h / jnp.maximum(nrm, 1e-12)


if __name__ == "__main__":
    # Small deterministic problem: N nodes, D = dim_in = dim_out (skipsum), L layers.
    # N = 300 / D = 48 exercise both the row padding (Np = 384) and the lane
    # padding (Dp = 128) paths.
    N, D, L = 300, 48, 3
    key = jax.random.PRNGKey(0)
    k_adj, k_x, k_w = jax.random.split(key, 3)

    # Random undirected graph -> dense symmetric adjacency with self loops,
    # symmetric GCN normalization D^{-1/2}(A+I)D^{-1/2}.
    adj_rand = (jax.random.uniform(k_adj, (N, N)) < 0.05).astype(jnp.float32)
    adj = jnp.maximum(adj_rand, adj_rand.T)
    adj = adj * (1.0 - jnp.eye(N)) + jnp.eye(N)          # A + I (self loops)
    deg = jnp.sum(adj, axis=1)
    d_inv_sqrt = 1.0 / jnp.sqrt(jnp.maximum(deg, 1.0))
    a_norm = (d_inv_sqrt[:, None] * adj) * d_inv_sqrt[None, :]

    # Node features and per-layer GCN weights (Glorot-ish, no bias).
    x = jax.random.normal(k_x, (N, D), dtype=jnp.float32)
    scale = 1.0 / np.sqrt(D)
    weights = scale * jax.random.normal(k_w, (L, D, D), dtype=jnp.float32)

    ref = jax.block_until_ready(reference(a_norm, weights, x))

    # 1) Default path: resident bf16 adjacency, bf16 MXU operands, f32 accumulate.
    out = jax.block_until_ready(gnn_standard_stage(a_norm, weights, x))
    np.testing.assert_allclose(np.asarray(out), np.asarray(ref), rtol=5e-2, atol=5e-2)

    # 2) Reference-accurate path: f32 adjacency + f32 matmuls (both sides use
    #    JAX's default TPU dot precision, so they match tightly).
    out_f32 = jax.block_until_ready(
        gnn_standard_stage(a_norm, weights, x,
                           matmul_dtype=jnp.float32, a_dtype=jnp.float32))
    np.testing.assert_allclose(np.asarray(out_f32), np.asarray(ref),
                               rtol=2e-4, atol=2e-4)

    # 3) Streaming fallback (large-graph code path), exercised at small N.
    out_stream = jax.block_until_ready(
        gnn_standard_stage(a_norm, weights, x, force_stream_a=True))
    np.testing.assert_allclose(np.asarray(out_stream), np.asarray(ref),
                               rtol=5e-2, atol=5e-2)

    print("KERNEL_OK")
</pallas_src>

<mosaic_0001>
module attributes {stable_mosaic.version = 11 : i64} {
  func.func @_gnn_stage_kernel(%arg0: i32, %arg1: i32, %arg2: memref<384x384xbf16, #tpu.memory_space<any>>, %arg3: memref<1x128x128xf32, #tpu.memory_space<vmem>>, %arg4: memref<384x128xf32, #tpu.memory_space<any>>, %arg5: memref<192x128xf32, #tpu.memory_space<vmem>>, %arg6: memref<384x384xbf16, #tpu.memory_space<vmem>>, %arg7: memref<384x128xf32, #tpu.memory_space<vmem>>, %arg8: memref<384x128xbf16, #tpu.memory_space<vmem>>, %arg9: memref<2x!tpu.dma_semaphore, #tpu.memory_space<semaphore_mem>>) attributes {dimension_semantics = [#tpu.dimension_semantics<arbitrary>, #tpu.dimension_semantics<arbitrary>], iteration_bounds = array<i64: 3, 2>, scalar_prefetch = 0 : i64, scratch_operands = 4 : i64, tpu.core_type = #tpu.core_type<tc>, window_params = [{}, {transform_indices = @transform_1, window_bounds = array<i64: 1, 128, 128>}, {}, {transform_indices = @transform_3, window_bounds = array<i64: 192, 128>}]} {
    %c0_i32 = arith.constant 0 : i32
    %0 = arith.cmpi eq, %arg0, %c0_i32 : i32
    %c0_i32_0 = arith.constant 0 : i32
    %1 = arith.cmpi eq, %arg1, %c0_i32_0 : i32
    %2 = arith.andi %0, %1 : i1
    %3 = arith.extui %2 : i1 to i32
    %c0_i32_1 = arith.constant 0 : i32
    %4 = arith.cmpi ne, %3, %c0_i32_1 : i32
    scf.if %4 {
      %c0_i32_10 = arith.constant 0 : i32
      %24 = tpu.memref_slice %arg9[%c0_i32_10] : memref<2x!tpu.dma_semaphore, #tpu.memory_space<semaphore_mem>> -> memref<1x!tpu.dma_semaphore, #tpu.memory_space<semaphore_mem>>
      %25 = tpu.memref_squeeze %24 : memref<1x!tpu.dma_semaphore, #tpu.memory_space<semaphore_mem>> -> memref<!tpu.dma_semaphore, #tpu.memory_space<semaphore_mem>>
      tpu.enqueue_dma source(%arg4 : memref<384x128xf32, #tpu.memory_space<any>>) target(%arg7 : memref<384x128xf32, #tpu.memory_space<vmem>>) target_semaphore(%25 : memref<!tpu.dma_semaphore, #tpu.memory_space<semaphore_mem>>)
      %c1_i32 = arith.constant 1 : i32
      %26 = tpu.memref_slice %arg9[%c1_i32] : memref<2x!tpu.dma_semaphore, #tpu.memory_space<semaphore_mem>> -> memref<1x!tpu.dma_semaphore, #tpu.memory_space<semaphore_mem>>
      %27 = tpu.memref_squeeze %26 : memref<1x!tpu.dma_semaphore, #tpu.memory_space<semaphore_mem>> -> memref<!tpu.dma_semaphore, #tpu.memory_space<semaphore_mem>>
      tpu.enqueue_dma source(%arg2 : memref<384x384xbf16, #tpu.memory_space<any>>) target(%arg6 : memref<384x384xbf16, #tpu.memory_space<vmem>>) target_semaphore(%27 : memref<!tpu.dma_semaphore, #tpu.memory_space<semaphore_mem>>)
      %c0_i32_11 = arith.constant 0 : i32
      %28 = tpu.memref_slice %arg9[%c0_i32_11] : memref<2x!tpu.dma_semaphore, #tpu.memory_space<semaphore_mem>> -> memref<1x!tpu.dma_semaphore, #tpu.memory_space<semaphore_mem>>
      %29 = tpu.memref_squeeze %28 : memref<1x!tpu.dma_semaphore, #tpu.memory_space<semaphore_mem>> -> memref<!tpu.dma_semaphore, #tpu.memory_space<semaphore_mem>>
      tpu.wait_dma2 semaphore(%29 : memref<!tpu.dma_semaphore, #tpu.memory_space<semaphore_mem>>) src(%arg4 : memref<384x128xf32, #tpu.memory_space<any>>) dst(%arg7 : memref<384x128xf32, #tpu.memory_space<vmem>>)
      %c1_i32_12 = arith.constant 1 : i32
      %30 = tpu.memref_slice %arg9[%c1_i32_12] : memref<2x!tpu.dma_semaphore, #tpu.memory_space<semaphore_mem>> -> memref<1x!tpu.dma_semaphore, #tpu.memory_space<semaphore_mem>>
      %31 = tpu.memref_squeeze %30 : memref<1x!tpu.dma_semaphore, #tpu.memory_space<semaphore_mem>> -> memref<!tpu.dma_semaphore, #tpu.memory_space<semaphore_mem>>
      tpu.wait_dma2 semaphore(%31 : memref<!tpu.dma_semaphore, #tpu.memory_space<semaphore_mem>>) src(%arg2 : memref<384x384xbf16, #tpu.memory_space<any>>) dst(%arg6 : memref<384x384xbf16, #tpu.memory_space<vmem>>)
    } else {
    }
    %c0_i32_2 = arith.constant 0 : i32
    %5 = arith.cmpi eq, %arg1, %c0_i32_2 : i32
    %6 = arith.extui %5 : i1 to i32
    %c0_i32_3 = arith.constant 0 : i32
    %7 = arith.cmpi ne, %6, %c0_i32_3 : i32
    scf.if %7 {
      %c0_10 = arith.constant 0 : index
      %c0_11 = arith.constant 0 : index
      %24 = vector.load %arg7[%c0_10, %c0_11] : memref<384x128xf32, #tpu.memory_space<vmem>>, vector<384x128xf32>
      %25 = arith.truncf %24 : vector<384x128xf32> to vector<384x128xbf16>
      %c0_12 = arith.constant 0 : index
      %c0_13 = arith.constant 0 : index
      %c0_14 = arith.constant 0 : index
      %26 = vector.load %arg3[%c0_12, %c0_13, %c0_14] : memref<1x128x128xf32, #tpu.memory_space<vmem>>, vector<1x128x128xf32>
      %27 = vector.shape_cast %26 : vector<1x128x128xf32> to vector<128x128xf32>
      %28 = arith.truncf %27 : vector<128x128xf32> to vector<128x128xbf16>
      %cst_15 = arith.constant dense<0.000000e+00> : vector<384x128xf32>
      %29 = tpu.matmul %25, %28, %cst_15 {dimension_numbers = #tpu.dot_dimension_numbers<[1], [0], [0], [1], [0, 0, 1, 1], [], []>} : vector<384x128xbf16>, vector<128x128xbf16>, vector<384x128xf32> -> vector<384x128xf32>
      %30 = arith.truncf %29 : vector<384x128xf32> to vector<384x128xbf16>
      %c0_16 = arith.constant 0 : index
      %c0_17 = arith.constant 0 : index
      %31 = vector.load %arg8[%c0_16, %c0_17] : memref<384x128xbf16, #tpu.memory_space<vmem>>, vector<384x128xbf16>
      tpu.vector_store %arg8[%c0_16, %c0_17], %30 {strides = array<i32>} : memref<384x128xbf16, #tpu.memory_space<vmem>>, vector<384x128xbf16>,
    } else {
    }
    %c192_i32 = arith.constant 192 : i32
    %8 = arith.muli %arg1, %c192_i32 : i32
    %9 = tpu.assume_multiple %8, 192 : i32
    %10 = arith.index_cast %9 : i32 to index
    %c0 = arith.constant 0 : index
    %11 = vector.load %arg7[%10, %c0] : memref<384x128xf32, #tpu.memory_space<vmem>>, vector<192x128xf32>
    %12 = arith.index_cast %9 : i32 to index
    %c0_4 = arith.constant 0 : index
    %13 = vector.load %arg6[%12, %c0_4] : memref<384x384xbf16, #tpu.memory_space<vmem>>, vector<192x384xbf16>
    %c0_5 = arith.constant 0 : index
    %c0_6 = arith.constant 0 : index
    %14 = vector.load %arg8[%c0_5, %c0_6] : memref<384x128xbf16, #tpu.memory_space<vmem>>, vector<384x128xbf16>
    %cst = arith.constant dense<0.000000e+00> : vector<192x128xf32>
    %15 = tpu.matmul %13, %14, %cst {dimension_numbers = #tpu.dot_dimension_numbers<[1], [0], [0], [1], [0, 0, 1, 1], [], []>} : vector<192x384xbf16>, vector<384x128xbf16>, vector<192x128xf32> -> vector<192x128xf32>
    %cst_7 = arith.constant 0.000000e+00 : f32
    %16 = vector.broadcast %cst_7 : f32 to vector<192x128xf32>
    %17 = arith.maximumf %15, %16 : vector<192x128xf32>
    %18 = arith.addf %11, %17 : vector<192x128xf32>
    %19 = arith.index_cast %9 : i32 to index
    %c0_8 = arith.constant 0 : index
    %20 = vector.load %arg7[%19, %c0_8] : memref<384x128xf32, #tpu.memory_space<vmem>>, vector<192x128xf32>
    tpu.vector_store %arg7[%19, %c0_8], %18 {strides = array<i32>} : memref<384x128xf32, #tpu.memory_space<vmem>>, vector<192x128xf32>,
    %c2_i32 = arith.constant 2 : i32
    %21 = arith.cmpi eq, %arg0, %c2_i32 : i32
    %22 = arith.extui %21 : i1 to i32
    %c0_i32_9 = arith.constant 0 : i32
    %23 = arith.cmpi ne, %22, %c0_i32_9 : i32
    scf.if %23 {
      %24 = arith.mulf %18, %18 : vector<192x128xf32>
      %cst_10 = arith.constant dense<0.000000e+00> : vector<192xf32>
      %25 = vector.multi_reduction <add>, %24, %cst_10 [1] : vector<192x128xf32> to vector<192xf32>
      %26 = vector.shape_cast %25 : vector<192xf32> to vector<192x1xf32>
      %cst_11 = arith.constant 1.000000e-24 : f32
      %27 = vector.broadcast %cst_11 : f32 to vector<192x1xf32>
      %28 = arith.maximumf %26, %27 : vector<192x1xf32>
      %29 = math.rsqrt %28 : vector<192x1xf32>
      %30 = vector.broadcast %29 : vector<192x1xf32> to vector<192x128xf32>
      %31 = arith.mulf %18, %30 : vector<192x128xf32>
      %c0_12 = arith.constant 0 : index
      %c0_13 = arith.constant 0 : index
      %32 = vector.load %arg5[%c0_12, %c0_13] : memref<192x128xf32, #tpu.memory_space<vmem>>, vector<192x128xf32>
      tpu.vector_store %arg5[%c0_12, %c0_13], %31 {strides = array<i32>} : memref<192x128xf32, #tpu.memory_space<vmem>>, vector<192x128xf32>,
    } else {
    }
    return
  }
  func.func @transform_1(%arg0: i32, %arg1: i32) -> (i32, i32, i32) {
    %c0_i32 = arith.constant 0 : i32
    %c0_i32_0 = arith.constant 0 : i32
    %c0_i32_1 = arith.constant 0 : i32
    return %arg0, %c0_i32, %c0_i32_0 : i32, i32, i32
  }
  func.func @transform_3(%arg0: i32, %arg1: i32) -> (i32, i32) {
    %c2_i32 = arith.constant 2 : i32
    %0 = arith.cmpi eq, %arg0, %c2_i32 : i32
    %c0_i32 = arith.constant 0 : i32
    %1 = arith.select %0, %arg1, %c0_i32 : i32
    %c0_i32_0 = arith.constant 0 : i32
    %c0_i32_1 = arith.constant 0 : i32
    return %1, %c0_i32_0 : i32, i32
  }
}

</mosaic_0001>

<llo_original>
// kernel: tpu_custom_call.1
$region0: #{tpu_custom_call.1}
  #allocation0 [shape = 'u32[]', space=smem, size = 0x4, offset = 0x4, fixed_abs, tag = 'smem constant byte address 0x4 - core index']
  #allocation1 [shape = 'u32[72,128]{1,0:T(1,128)}', space=vmem, size = 0x9000, scoped, tag = 'internal scratch']
  #allocation2 [shape = 'bf16[384,384]{1,0:T(8,128)(2,1)}', space=vmem, size = 0x48000, scoped, tag = 'scratch operand']
  #allocation3 [shape = 'f32[384,128]{1,0:T(8,128)}', space=vmem, size = 0x30000, scoped, tag = 'scratch operand']
  #allocation4 [shape = 'bf16[384,128]{1,0:T(8,128)(2,1)}', space=vmem, size = 0x18000, scoped, tag = 'scratch operand']
  #allocation5 [shape = 's32[2]{0}', space=sflag, size = 0x8, scoped, tag = 'scratch operand']
  #allocation10 [shape = 's32[]', space=sflag, size = 0x4, offset = 0, fixed_abs, tag = 'sflag constant byte address 0x0 - dummy sync flag']
  #allocation11 [shape = 's32[]', space=sflag, size = 0x4, offset = 0, fixed_abs, tag = 'sflag constant byte address 0x0 - dummy sync flag']
  #allocation12 [shape = 'u32[]', space=smem, size = 0x4, offset = 0x44, fixed_abs, tag = 'smem constant byte address 0x44 - assertion arg 0']
  #allocation13 [shape = 'u32[]', space=smem, size = 0x4, offset = 0x48, fixed_abs, tag = 'smem constant byte address 0x48 - assertion arg 1']
  #allocation14 [shape = 's32[]', space=sflag, size = 0x4, offset = 0, fixed_abs, tag = 'sflag constant byte address 0x0 - dummy sync flag']
  #allocation15 [shape = 's32[]', space=sflag, size = 0x4, offset = 0, fixed_abs, tag = 'sflag constant byte address 0x0 - dummy sync flag']
  %s0 = inlined_call_operand.hbm [shape: bf16[384,384], index: 0, kind: input, shape index: {}]
  %s1 = inlined_call_operand.hbm [shape: f32[3,128,128], index: 1, kind: input, shape index: {}]
  %s2 = inlined_call_operand.hbm [shape: f32[384,128], index: 2, kind: input, shape index: {}]
  %s3 = inlined_call_operand.hbm [shape: f32[384,128], index: 3, kind: output, shape index: {}]
  %s4 = sld [smem:[#allocation0]]
  $region61: #{tpu_custom_call.1} parent=0
    _
  %s6 = ssub.s32 1, %s4
  %s7 = scalar_select 0, %s6, %s4
  $region1: #{tpu_custom_call.1} parent=0
    #allocation6 [shape = 'u8[131072]{0}', space=vmem, size = 0x20000, scoped, tag = 'input window, operand 1']
    #allocation7 [shape = 's32[2]{0}', space=sflag, size = 0x8, scoped, tag = 'scoped memory for tpu_custom_call.1']
    #allocation8 [shape = 's32[2]{0}', space=sflag, size = 0x8, scoped, tag = 'scoped memory for tpu_custom_call.1']
    #allocation9 [shape = 'u8[196608]{0}', space=vmem, size = 0x30000, scoped, tag = 'output window, operand 0']
    %8 = vsyncpa [#allocation7], 0
    %s9 = scalar_lea.sflag [#allocation7], 1
    %10 = vsyncpa %s9, 0
    %11 = vsyncpa [#allocation8], 0
    %s12 = scalar_lea.sflag [#allocation8], 1
    %13 = vsyncpa %s12, 0
    loop: start=0, step=1, limit=8
    $region2: #{tpu_custom_call.1} parent=1 // loop_pre_header
      _
    $region3: #{tpu_custom_call.1} parent=1 // loop_header
      %s15 = sphi 0, %s19
      %p16 = scmp.ge.s32.totalorder %s15, 8
      %s22 = sphi 0, %s34
      %s23 = sphi 0, %s30
      %s24 = sphi 0, %s22
      %s25 = sphi 0, %s23
      %s26 = sphi 0, %s24
      %s27 = sphi 0, %s25
      %s37 = sphi 0, %s39
      %s40 = sphi 0, %s37
      %s41 = sphi 0, %s40
      %s57 = sphi 0, %s41
      %s67 = sphi 0, %s69
      %s70 = sphi 0, %s67
      %s71 = sphi 0, %s70
      %s87 = sphi 0, %s71
    $region4: #{tpu_custom_call.1} parent=1 // loop_header_branch
      %18 = sbr.rel (%p16) target = $region8
    $region5: #{tpu_custom_call.1} parent=1 // loop_body
      %s20 = ssub.s32 %s15, 1
      %s21 = ssub.s32 %s15, 2
      %s28 = sadd.s32 1, %s23
      %p29 = scmp.ge.s32.totalorder %s28, 2
      %s30 = scalar_select %p29, 0, %s28
      %s31 = sadd.s32 1, %s22
      %s32 = scalar_select %p29, %s31, %s22
      %p33 = scmp.ge.s32.totalorder %s32, 3
      %s34 = scalar_select %p33, 0, %s32
      %s35 = ssub.s32 %s22, %s34
      %p36 = scmp.eq.s32.totalorder %s35, 0
      %s38 = sadd.s32 %s37, 1
      %s39 = scalar_select %p36, %s37, %s38
      %p42 = pneg %p36
      %p43 = scmp.eq.s32.totalorder %s15, 5
      %p44 = por %p42, %p43
      %p45 = scmp.ne.s32.totalorder %s37, %s40
      %p46 = scmp.eq.s32.totalorder %s15, 0
      %p47 = por %p45, %p46
      %p48 = scmp.ne.s32.totalorder %s37, %s40
      %p49 = scmp.eq.s32.totalorder %s20, 5
      %p50 = por %p48, %p49
      %p51 = scmp.ne.s32.totalorder %s40, %s41
      %p52 = scmp.eq.s32.totalorder %s20, 0
      %p53 = por %p51, %p52
      %p54 = scmp.ne.s32.totalorder %s40, %s41
      %p55 = scmp.eq.s32.totalorder %s21, 5
      %p56 = por %p54, %p55
      %p58 = scmp.ne.s32.totalorder %s41, %s57
      %p59 = scmp.eq.s32.totalorder %s21, 0
      %p60 = por %p58, %p59
      %p61 = scmp.eq.s32.totalorder %s22, 2
      %s62 = scalar_select %p61, %s23, 0
      %p63 = scmp.eq.s32.totalorder %s34, 2
      %s64 = scalar_select %p63, %s30, 0
      %s65 = ssub.s32 %s62, %s64
      %p66 = scmp.eq.s32.totalorder %s65, 0
      %s68 = sadd.s32 %s67, 1
      %s69 = scalar_select %p66, %s67, %s68
      %p72 = pneg %p66
      %p73 = scmp.eq.s32.totalorder %s15, 5
      %p74 = por %p72, %p73
      %p75 = scmp.ne.s32.totalorder %s67, %s70
      %p76 = scmp.eq.s32.totalorder %s15, 0
      %p77 = por %p75, %p76
      %p78 = scmp.ne.s32.totalorder %s67, %s70
      %p79 = scmp.eq.s32.totalorder %s20, 5
      %p80 = por %p78, %p79
      %p81 = scmp.ne.s32.totalorder %s70, %s71
      %p82 = scmp.eq.s32.totalorder %s20, 0
      %p83 = por %p81, %p82
      %p84 = scmp.ne.s32.totalorder %s70, %s71
      %p85 = scmp.eq.s32.totalorder %s21, 5
      %p86 = por %p84, %p85
      %p88 = scmp.ne.s32.totalorder %s71, %s87
      %p89 = scmp.eq.s32.totalorder %s21, 0
      %p90 = por %p88, %p89
      %p91 = scmp.le.s32.totalorder 1, %s15
      %p92 = scmp.lt.s32.totalorder %s15, 7
      %p93 = pnand %p91, %p92
      %p94 = pneg %p93
      // Predicated region
      $region9: #{tpu_custom_call.1} parent=5 // pred_check
        _
      $region10: #{tpu_custom_call.1} parent=5 // pred_check_branch
        %96 = sbr.rel (%p93) target = $region12
      $region11: #{tpu_custom_call.1} parent=5 // pred_region
        %s97 = ssub.s32 %s15, 1
      $region12: #{tpu_custom_call.1} parent=5 // pred_fallthru
        _
      %p98 = scmp.lt.s32.totalorder %s15, 6
      // Predicated region
      $region13: #{tpu_custom_call.1} parent=5 // pred_check
        %p99 = pneg %p98
      $region14: #{tpu_custom_call.1} parent=5 // pred_check_branch
        %101 = sbr.rel (%p99) target = $region16
      $region15: #{tpu_custom_call.1} parent=5 // pred_region
        // Predicated region
        $region17: #{tpu_custom_call.1} parent=15 // pred_check
          %p102 = pneg %p47
        $region18: #{tpu_custom_call.1} parent=15 // pred_check_branch
          %104 = sbr.rel (%p102) target = $region20
        $region19: #{tpu_custom_call.1} parent=15 // pred_region
          %s105 = sand.u32 %s37, 1
          %s106 = scalar_lea.sflag [#allocation7], %s105
          %s107 = sand.u32 %s37, 1
          %s108 = smul.addr %s107, 128
          %s109 = scalar_lea.vmem [#allocation6], %s108
          %111 = vsyncadd %s106, 0
          %s112 = smul.addr %s22, 16
          %s113 = smul.addr %s112, 8
          %s114 = scalar_lea.hbm %s1, %s113
          %s115 = sshll.u32 %s114, 4
          %s116 = int_to_ptr.hbm [resolvable:$true] %s115
          %s117 = sshll.u32 %s109, 4
          %s118 = int_to_ptr.vmem [resolvable:$true] %s117
          %123 = dma.hbm_to_vmem [thread:$0]  %s116, 2048, %s118, %s106, 128, 128, 8
        $region20: #{tpu_custom_call.1} parent=15 // pred_fallthru
          _
      $region16: #{tpu_custom_call.1} parent=5 // pred_fallthru
        _
      %p124 = scmp.le.s32.totalorder 1, %s15
      %p125 = scmp.lt.s32.totalorder %s15, 7
      %p126 = pnand %p124, %p125
      %p127 = pneg %p126
      // Predicated region
      $region21: #{tpu_custom_call.1} parent=5 // pred_check
        _
      $region22: #{tpu_custom_call.1} parent=5 // pred_check_branch
        %129 = sbr.rel (%p126) target = $region24
      $region23: #{tpu_custom_call.1} parent=5 // pred_region
        %s130 = ssub.s32 %s15, 1
        %s131 = sand.u32 %s40, 1
        %s132 = scalar_lea.sflag [#allocation7], %s131
        %s133 = sand.u32 %s40, 1
        %s134 = smul.addr %s133, 128
        %s135 = scalar_lea.vmem [#allocation6], %s134
        // Predicated region
        $region25: #{tpu_custom_call.1} parent=23 // pred_check
          %p136 = pneg %p53
        $region26: #{tpu_custom_call.1} parent=23 // pred_check_branch
          %138 = sbr.rel (%p136) target = $region28
        $region27: #{tpu_custom_call.1} parent=23 // pred_region
          %140 = dma.done %s132, 2048
        $region28: #{tpu_custom_call.1} parent=23 // pred_fallthru
          _
        %s141 = sand.u32 %s40, 1
        %s142 = scalar_lea.sflag [#allocation7], %s141
        %s143 = sand.u32 %s40, 1
        %s144 = smul.addr %s143, 128
        %s145 = scalar_lea.vmem [#allocation6], %s144
        %p146 = pneg %p53
        %p147 = pneg %p50
        %p148 = pneg %p83
        %p149 = pneg %p80
        %s150 = sand.u32 %s70, 1
        %s151 = scalar_lea.sflag [#allocation8], %s150
        %s152 = sand.u32 %s70, 1
        %s153 = smul.addr %s152, 192
        %s154 = scalar_lea.vmem [#allocation9], %s153
        %p155 = scmp.eq.s32.totalorder %s24, 2
        %s156 = scalar_select %p155, %s25, 0
        %s157 = smul.u32 24, %s156
        %p158 = scmp.eq.s32.totalorder %s24, 0
        %p159 = scmp.eq.s32.totalorder %s25, 0
        %p160 = pnand %p158, %p159
        %p161 = pneg %p160
        // Predicated region
        $region29: #{tpu_custom_call.1} parent=23 // pred_check
          _
        $region30: #{tpu_custom_call.1} parent=23 // pred_check_branch
          %163 = sbr.rel (%p160) target = $region32
        $region31: #{tpu_custom_call.1} parent=23 // pred_region
          // Predicated region
          $region33: #{tpu_custom_call.1} parent=31 // pred_check
            _
          $region34: #{tpu_custom_call.1} parent=31 // pred_check_branch
            %165 = sbr.rel target = $region36
          $region35: #{tpu_custom_call.1} parent=31 // pred_region
            %166 = sst [smem:[#allocation12]] [#allocation11]
            %167 = sst [smem:[#allocation13]] [#allocation10]
          $region36: #{tpu_custom_call.1} parent=31 // pred_fallthru
            _
          %169 = shalt.err (0)
          %s171 = sshll.u32 %s2, 4
          %s172 = int_to_ptr.hbm [resolvable:$true] %s171
          %s173 = sshll.u32 [#allocation3], 4
          %s174 = int_to_ptr.vmem [resolvable:$true] %s173
          %176 = dma.hbm_to_vmem [thread:$0]  %s172, 6144, %s174, [#allocation5]
          %s177 = scalar_lea.sflag [#allocation5], 1
          // Predicated region
          $region37: #{tpu_custom_call.1} parent=31 // pred_check
            _
          $region38: #{tpu_custom_call.1} parent=31 // pred_check_branch
            %179 = sbr.rel target = $region40
          $region39: #{tpu_custom_call.1} parent=31 // pred_region
            %180 = sst [smem:[#allocation12]] [#allocation15]
            %181 = sst [smem:[#allocation13]] [#allocation14]
          $region40: #{tpu_custom_call.1} parent=31 // pred_fallthru
            _
          %183 = shalt.err (0)
          %s185 = sshll.u32 %s0, 4
          %s186 = int_to_ptr.hbm [resolvable:$true] %s185
          %s187 = sshll.u32 [#allocation2], 4
          %s188 = int_to_ptr.vmem [resolvable:$true] %s187
          %190 = dma.hbm_to_vmem [thread:$0]  %s186, 9216, %s188, %s177
          %s191 = smul.u32 384, 1
          %s192 = sshll.u32 %s191, 4
          %193 = dma.done [#allocation5], %s192
          %s194 = smul.u32 4, 48
          %s195 = smul.u32 %s194, 3
          %s196 = sshll.u32 %s195, 4
          %197 = dma.done %s177, %s196
        $region32: #{tpu_custom_call.1} parent=23 // pred_fallthru
          _
        // Predicated region
        $region41: #{tpu_custom_call.1} parent=23 // pred_check
          %p198 = pneg %p159
        $region42: #{tpu_custom_call.1} parent=23 // pred_check_branch
          %200 = sbr.rel (%p198) target = $region44
        $region43: #{tpu_custom_call.1} parent=23 // pred_region
          %v201 = vld [vmem:[#allocation3] sm:$0xff]
          %v202 = vld [vmem:[#allocation3 + $0x8] sm:$0xff]
          %v203 = vld [vmem:[#allocation3 + $0x10] sm:$0xff]
          %v204 = vld [vmem:[#allocation3 + $0x18] sm:$0xff]
          %v205 = vld [vmem:[#allocation3 + $0x20] sm:$0xff]
          %v206 = vld [vmem:[#allocation3 + $0x28] sm:$0xff]
          %v207 = vld [vmem:[#allocation3 + $0x30] sm:$0xff]
          %v208 = vld [vmem:[#allocation3 + $0x38] sm:$0xff]
          %v209 = vld [vmem:[#allocation3 + $0x40] sm:$0xff]
          %v210 = vld [vmem:[#allocation3 + $0x48] sm:$0xff]
          %v211 = vld [vmem:[#allocation3 + $0x50] sm:$0xff]
          %v212 = vld [vmem:[#allocation3 + $0x58] sm:$0xff]
          %v213 = vld [vmem:[#allocation3 + $0x60] sm:$0xff]
          %v214 = vld [vmem:[#allocation3 + $0x68] sm:$0xff]
          %v215 = vld [vmem:[#allocation3 + $0x70] sm:$0xff]
          %v216 = vld [vmem:[#allocation3 + $0x78] sm:$0xff]
          %v217 = vld [vmem:[#allocation3 + $0x80] sm:$0xff]
          %v218 = vld [vmem:[#allocation3 + $0x88] sm:$0xff]
          %v219 = vld [vmem:[#allocation3 + $0x90] sm:$0xff]
          %v220 = vld [vmem:[#allocation3 + $0x98] sm:$0xff]
          %v221 = vld [vmem:[#allocation3 + $0xa0] sm:$0xff]
          %v222 = vld [vmem:[#allocation3 + $0xa8] sm:$0xff]
          %v223 = vld [vmem:[#allocation3 + $0xb0] sm:$0xff]
          %v224 = vld [vmem:[#allocation3 + $0xb8] sm:$0xff]
          %v225 = vld [vmem:[#allocation3 + $0xc0] sm:$0xff]
          %v226 = vld [vmem:[#allocation3 + $0xc8] sm:$0xff]
          %v227 = vld [vmem:[#allocation3 + $0xd0] sm:$0xff]
          %v228 = vld [vmem:[#allocation3 + $0xd8] sm:$0xff]
          %v229 = vld [vmem:[#allocation3 + $0xe0] sm:$0xff]
          %v230 = vld [vmem:[#allocation3 + $0xe8] sm:$0xff]
          %v231 = vld [vmem:[#allocation3 + $0xf0] sm:$0xff]
          %v232 = vld [vmem:[#allocation3 + $0xf8] sm:$0xff]
          %v233 = vld [vmem:[#allocation3 + $0x100] sm:$0xff]
          %v234 = vld [vmem:[#allocation3 + $0x108] sm:$0xff]
          %v235 = vld [vmem:[#allocation3 + $0x110] sm:$0xff]
          %v236 = vld [vmem:[#allocation3 + $0x118] sm:$0xff]
          %v237 = vld [vmem:[#allocation3 + $0x120] sm:$0xff]
          %v238 = vld [vmem:[#allocation3 + $0x128] sm:$0xff]
          %v239 = vld [vmem:[#allocation3 + $0x130] sm:$0xff]
          %v240 = vld [vmem:[#allocation3 + $0x138] sm:$0xff]
          %v241 = vld [vmem:[#allocation3 + $0x140] sm:$0xff]
          %v242 = vld [vmem:[#allocation3 + $0x148] sm:$0xff]
          %v243 = vld [vmem:[#allocation3 + $0x150] sm:$0xff]
          %v244 = vld [vmem:[#allocation3 + $0x158] sm:$0xff]
          %v245 = vld [vmem:[#allocation3 + $0x160] sm:$0xff]
          %v246 = vld [vmem:[#allocation3 + $0x168] sm:$0xff]
          %v247 = vld [vmem:[#allocation3 + $0x170] sm:$0xff]
          %v248 = vld [vmem:[#allocation3 + $0x178] sm:$0xff]
          %v249 = vpack.c.bf16 %v202, %v201
          %v250 = vpack.c.bf16 %v204, %v203
          %v251 = vpack.c.bf16 %v206, %v205
          %v252 = vpack.c.bf16 %v208, %v207
          %v253 = vpack.c.bf16 %v210, %v209
          %v254 = vpack.c.bf16 %v212, %v211
          %v255 = vpack.c.bf16 %v214, %v213
          %v256 = vpack.c.bf16 %v216, %v215
          %v257 = vpack.c.bf16 %v218, %v217
          %v258 = vpack.c.bf16 %v220, %v219
          %v259 = vpack.c.bf16 %v222, %v221
          %v260 = vpack.c.bf16 %v224, %v223
          %v261 = vpack.c.bf16 %v226, %v225
          %v262 = vpack.c.bf16 %v228, %v227
          %v263 = vpack.c.bf16 %v230, %v229
          %v264 = vpack.c.bf16 %v232, %v231
          %v265 = vpack.c.bf16 %v234, %v233
          %v266 = vpack.c.bf16 %v236, %v235
          %v267 = vpack.c.bf16 %v238, %v237
          %v268 = vpack.c.bf16 %v240, %v239
          %v269 = vpack.c.bf16 %v242, %v241
          %v270 = vpack.c.bf16 %v244, %v243
          %v271 = vpack.c.bf16 %v246, %v245
          %v272 = vpack.c.bf16 %v248, %v247
          %v273 = vld [vmem:[%s135] sm:$0xff]
          %v274 = vld [vmem:[%s135 + $0x8] sm:$0xff]
          %v275 = vld [vmem:[%s135 + $0x10] sm:$0xff]
          %v276 = vld [vmem:[%s135 + $0x18] sm:$0xff]
          %v277 = vld [vmem:[%s135 + $0x20] sm:$0xff]
          %v278 = vld [vmem:[%s135 + $0x28] sm:$0xff]
          %v279 = vld [vmem:[%s135 + $0x30] sm:$0xff]
          %v280 = vld [vmem:[%s135 + $0x38] sm:$0xff]
          %v281 = vld [vmem:[%s135 + $0x40] sm:$0xff]
          %v282 = vld [vmem:[%s135 + $0x48] sm:$0xff]
          %v283 = vld [vmem:[%s135 + $0x50] sm:$0xff]
          %v284 = vld [vmem:[%s135 + $0x58] sm:$0xff]
          %v285 = vld [vmem:[%s135 + $0x60] sm:$0xff]
          %v286 = vld [vmem:[%s135 + $0x68] sm:$0xff]
          %v287 = vld [vmem:[%s135 + $0x70] sm:$0xff]
          %v288 = vld [vmem:[%s135 + $0x78] sm:$0xff]
          %v289 = vpack.c.bf16 %v274, %v273
          %v290 = vpack.c.bf16 %v276, %v275
          %v291 = vpack.c.bf16 %v278, %v277
          %v292 = vpack.c.bf16 %v280, %v279
          %v293 = vpack.c.bf16 %v282, %v281
          %v294 = vpack.c.bf16 %v284, %v283
          %v295 = vpack.c.bf16 %v286, %v285
          %v296 = vpack.c.bf16 %v288, %v287
          %297 = vmatpush.bf16.msra.mxu0 %v296
          %298 = vmatpush.bf16.msra.mxu0 %v295
          %299 = vmatpush.bf16.msra.mxu0 %v294
          %300 = vmatpush.bf16.msra.mxu0 %v293
          %301 = vmatpush.bf16.msra.mxu0 %v292
          %302 = vmatpush.bf16.msra.mxu0 %v291
          %303 = vmatpush.bf16.msra.mxu0 %v290
          %304 = vmatpush.bf16.msra.mxu0 %v289
          %305 = vmatmul.bf16.gmra.mxu0 %v249
          %v306 = vpop.f32.mrf.mxu0
          %v307 = vadd.f32 0.0, %v306
          %v308 = vpop.f32.mrf.mxu0
          %v309 = vadd.f32 0.0, %v308
          %310 = vmatmul.bf16.gmra.mxu0 %v250
          %v311 = vpop.f32.mrf.mxu0
          %v312 = vadd.f32 0.0, %v311
          %v313 = vpop.f32.mrf.mxu0
          %v314 = vadd.f32 0.0, %v313
          %315 = vmatmul.bf16.gmra.mxu0 %v251
          %v316 = vpop.f32.mrf.mxu0
          %v317 = vadd.f32 0.0, %v316
          %v318 = vpop.f32.mrf.mxu0
          %v319 = vadd.f32 0.0, %v318
          %320 = vmatmul.bf16.gmra.mxu0 %v252
          %v321 = vpop.f32.mrf.mxu0
          %v322 = vadd.f32 0.0, %v321
          %v323 = vpop.f32.mrf.mxu0
          %v324 = vadd.f32 0.0, %v323
          %325 = vmatmul.bf16.gmra.mxu0 %v253
          %v326 = vpop.f32.mrf.mxu0
          %v327 = vadd.f32 0.0, %v326
          %v328 = vpop.f32.mrf.mxu0
          %v329 = vadd.f32 0.0, %v328
          %330 = vmatmul.bf16.gmra.mxu0 %v254
          %v331 = vpop.f32.mrf.mxu0
          %v332 = vadd.f32 0.0, %v331
          %v333 = vpop.f32.mrf.mxu0
          %v334 = vadd.f32 0.0, %v333
          %335 = vmatmul.bf16.gmra.mxu0 %v255
          %v336 = vpop.f32.mrf.mxu0
          %v337 = vadd.f32 0.0, %v336
          %v338 = vpop.f32.mrf.mxu0
          %v339 = vadd.f32 0.0, %v338
          %340 = vmatmul.bf16.gmra.mxu0 %v256
          %v341 = vpop.f32.mrf.mxu0
          %v342 = vadd.f32 0.0, %v341
          %v343 = vpop.f32.mrf.mxu0
          %v344 = vadd.f32 0.0, %v343
          %345 = vmatmul.bf16.gmra.mxu0 %v257
          %v346 = vpop.f32.mrf.mxu0
          %v347 = vadd.f32 0.0, %v346
          %v348 = vpop.f32.mrf.mxu0
          %v349 = vadd.f32 0.0, %v348
          %350 = vmatmul.bf16.gmra.mxu0 %v258
          %v351 = vpop.f32.mrf.mxu0
          %v352 = vadd.f32 0.0, %v351
          %v353 = vpop.f32.mrf.mxu0
          %v354 = vadd.f32 0.0, %v353
          %355 = vmatmul.bf16.gmra.mxu0 %v259
          %v356 = vpop.f32.mrf.mxu0
          %v357 = vadd.f32 0.0, %v356
          %v358 = vpop.f32.mrf.mxu0
          %v359 = vadd.f32 0.0, %v358
          %360 = vmatmul.bf16.gmra.mxu0 %v260
          %v361 = vpop.f32.mrf.mxu0
          %v362 = vadd.f32 0.0, %v361
          %v363 = vpop.f32.mrf.mxu0
          %v364 = vadd.f32 0.0, %v363
          %365 = vmatmul.bf16.gmra.mxu0 %v261
          %v366 = vpop.f32.mrf.mxu0
          %v367 = vadd.f32 0.0, %v366
          %v368 = vpop.f32.mrf.mxu0
          %v369 = vadd.f32 0.0, %v368
          %370 = vmatmul.bf16.gmra.mxu0 %v262
          %v371 = vpop.f32.mrf.mxu0
          %v372 = vadd.f32 0.0, %v371
          %v373 = vpop.f32.mrf.mxu0
          %v374 = vadd.f32 0.0, %v373
          %375 = vmatmul.bf16.gmra.mxu0 %v263
          %v376 = vpop.f32.mrf.mxu0
          %v377 = vadd.f32 0.0, %v376
          %v378 = vpop.f32.mrf.mxu0
          %v379 = vadd.f32 0.0, %v378
          %380 = vmatmul.bf16.gmra.mxu0 %v264
          %v381 = vpop.f32.mrf.mxu0
          %v382 = vadd.f32 0.0, %v381
          %v383 = vpop.f32.mrf.mxu0
          %v384 = vadd.f32 0.0, %v383
          %385 = vmatmul.bf16.gmra.mxu0 %v265
          %v386 = vpop.f32.mrf.mxu0
          %v387 = vadd.f32 0.0, %v386
          %v388 = vpop.f32.mrf.mxu0
          %v389 = vadd.f32 0.0, %v388
          %390 = vmatmul.bf16.gmra.mxu0 %v266
          %v391 = vpop.f32.mrf.mxu0
          %v392 = vadd.f32 0.0, %v391
          %v393 = vpop.f32.mrf.mxu0
          %v394 = vadd.f32 0.0, %v393
          %395 = vmatmul.bf16.gmra.mxu0 %v267
          %v396 = vpop.f32.mrf.mxu0
          %v397 = vadd.f32 0.0, %v396
          %v398 = vpop.f32.mrf.mxu0
          %v399 = vadd.f32 0.0, %v398
          %400 = vmatmul.bf16.gmra.mxu0 %v268
          %v401 = vpop.f32.mrf.mxu0
          %v402 = vadd.f32 0.0, %v401
          %v403 = vpop.f32.mrf.mxu0
          %v404 = vadd.f32 0.0, %v403
          %405 = vmatmul.bf16.gmra.mxu0 %v269
          %v406 = vpop.f32.mrf.mxu0
          %v407 = vadd.f32 0.0, %v406
          %v408 = vpop.f32.mrf.mxu0
          %v409 = vadd.f32 0.0, %v408
          %410 = vmatmul.bf16.gmra.mxu0 %v270
          %v411 = vpop.f32.mrf.mxu0
          %v412 = vadd.f32 0.0, %v411
          %v413 = vpop.f32.mrf.mxu0
          %v414 = vadd.f32 0.0, %v413
          %415 = vmatmul.bf16.gmra.mxu0 %v271
          %v416 = vpop.f32.mrf.mxu0
          %v417 = vadd.f32 0.0, %v416
          %v418 = vpop.f32.mrf.mxu0
          %v419 = vadd.f32 0.0, %v418
          %420 = vmatmul.bf16.gmra.mxu0 %v272
          %v421 = vpop.f32.mrf.mxu0
          %v422 = vadd.f32 0.0, %v421
          %v423 = vpop.f32.mrf.mxu0
          %v424 = vadd.f32 0.0, %v423
          %425 = vdwg.mxu0
          %v426 = vpack.c.bf16 %v307, %v307
          %v427 = vpack.c.bf16 %v309, %v309
          %v428 = vpack.c.bf16 %v312, %v312
          %v429 = vpack.c.bf16 %v314, %v314
          %v430 = vpack.c.bf16 %v317, %v317
          %v431 = vpack.c.bf16 %v319, %v319
          %v432 = vpack.c.bf16 %v322, %v322
          %v433 = vpack.c.bf16 %v324, %v324
          %v434 = vpack.c.bf16 %v327, %v327
          %v435 = vpack.c.bf16 %v329, %v329
          %v436 = vpack.c.bf16 %v332, %v332
          %v437 = vpack.c.bf16 %v334, %v334
          %v438 = vpack.c.bf16 %v337, %v337
          %v439 = vpack.c.bf16 %v339, %v339
          %v440 = vpack.c.bf16 %v342, %v342
          %v441 = vpack.c.bf16 %v344, %v344
          %v442 = vpack.c.bf16 %v347, %v347
          %v443 = vpack.c.bf16 %v349, %v349
          %v444 = vpack.c.bf16 %v352, %v352
          %v445 = vpack.c.bf16 %v354, %v354
          %v446 = vpack.c.bf16 %v357, %v357
          %v447 = vpack.c.bf16 %v359, %v359
          %v448 = vpack.c.bf16 %v362, %v362
          %v449 = vpack.c.bf16 %v364, %v364
          %v450 = vpack.c.bf16 %v367, %v367
          %v451 = vpack.c.bf16 %v369, %v369
          %v452 = vpack.c.bf16 %v372, %v372
          %v453 = vpack.c.bf16 %v374, %v374
          %v454 = vpack.c.bf16 %v377, %v377
          %v455 = vpack.c.bf16 %v379, %v379
          %v456 = vpack.c.bf16 %v382, %v382
          %v457 = vpack.c.bf16 %v384, %v384
          %v458 = vpack.c.bf16 %v387, %v387
          %v459 = vpack.c.bf16 %v389, %v389
          %v460 = vpack.c.bf16 %v392, %v392
          %v461 = vpack.c.bf16 %v394, %v394
          %v462 = vpack.c.bf16 %v397, %v397
          %v463 = vpack.c.bf16 %v399, %v399
          %v464 = vpack.c.bf16 %v402, %v402
          %v465 = vpack.c.bf16 %v404, %v404
          %v466 = vpack.c.bf16 %v407, %v407
          %v467 = vpack.c.bf16 %v409, %v409
          %v468 = vpack.c.bf16 %v412, %v412
          %v469 = vpack.c.bf16 %v414, %v414
          %v470 = vpack.c.bf16 %v417, %v417
          %v471 = vpack.c.bf16 %v419, %v419
          %v472 = vpack.c.bf16 %v422, %v422
          %v473 = vpack.c.bf16 %v424, %v424
          %474 = vst [vmem:[#allocation4] sm:$0xf] %v426
          %475 = vst [vmem:[#allocation4 + $0x4] sm:$0xf] %v427
          %476 = vst [vmem:[#allocation4 + $0x8] sm:$0xf] %v428
          %477 = vst [vmem:[#allocation4 + $0xc] sm:$0xf] %v429
          %478 = vst [vmem:[#allocation4 + $0x10] sm:$0xf] %v430
          %479 = vst [vmem:[#allocation4 + $0x14] sm:$0xf] %v431
          %480 = vst [vmem:[#allocation4 + $0x18] sm:$0xf] %v432
          %481 = vst [vmem:[#allocation4 + $0x1c] sm:$0xf] %v433
          %482 = vst [vmem:[#allocation4 + $0x20] sm:$0xf] %v434
          %483 = vst [vmem:[#allocation4 + $0x24] sm:$0xf] %v435
          %484 = vst [vmem:[#allocation4 + $0x28] sm:$0xf] %v436
          %485 = vst [vmem:[#allocation4 + $0x2c] sm:$0xf] %v437
          %486 = vst [vmem:[#allocation4 + $0x30] sm:$0xf] %v438
          %487 = vst [vmem:[#allocation4 + $0x34] sm:$0xf] %v439
          %488 = vst [vmem:[#allocation4 + $0x38] sm:$0xf] %v440
          %489 = vst [vmem:[#allocation4 + $0x3c] sm:$0xf] %v441
          %490 = vst [vmem:[#allocation4 + $0x40] sm:$0xf] %v442
          %491 = vst [vmem:[#allocation4 + $0x44] sm:$0xf] %v443
          %492 = vst [vmem:[#allocation4 + $0x48] sm:$0xf] %v444
          %493 = vst [vmem:[#allocation4 + $0x4c] sm:$0xf] %v445
          %494 = vst [vmem:[#allocation4 + $0x50] sm:$0xf] %v446
          %495 = vst [vmem:[#allocation4 + $0x54] sm:$0xf] %v447
          %496 = vst [vmem:[#allocation4 + $0x58] sm:$0xf] %v448
          %497 = vst [vmem:[#allocation4 + $0x5c] sm:$0xf] %v449
          %498 = vst [vmem:[#allocation4 + $0x60] sm:$0xf] %v450
          %499 = vst [vmem:[#allocation4 + $0x64] sm:$0xf] %v451
          %500 = vst [vmem:[#allocation4 + $0x68] sm:$0xf] %v452
          %501 = vst [vmem:[#allocation4 + $0x6c] sm:$0xf] %v453
          %502 = vst [vmem:[#allocation4 + $0x70] sm:$0xf] %v454
          %503 = vst [vmem:[#allocation4 + $0x74] sm:$0xf] %v455
          %504 = vst [vmem:[#allocation4 + $0x78] sm:$0xf] %v456
          %505 = vst [vmem:[#allocation4 + $0x7c] sm:$0xf] %v457
          %506 = vst [vmem:[#allocation4 + $0x80] sm:$0xf] %v458
          %507 = vst [vmem:[#allocation4 + $0x84] sm:$0xf] %v459
          %508 = vst [vmem:[#allocation4 + $0x88] sm:$0xf] %v460
          %509 = vst [vmem:[#allocation4 + $0x8c] sm:$0xf] %v461
          %510 = vst [vmem:[#allocation4 + $0x90] sm:$0xf] %v462
          %511 = vst [vmem:[#allocation4 + $0x94] sm:$0xf] %v463
          %512 = vst [vmem:[#allocation4 + $0x98] sm:$0xf] %v464
          %513 = vst [vmem:[#allocation4 + $0x9c] sm:$0xf] %v465
          %514 = vst [vmem:[#allocation4 + $0xa0] sm:$0xf] %v466
          %515 = vst [vmem:[#allocation4 + $0xa4] sm:$0xf] %v467
          %516 = vst [vmem:[#allocation4 + $0xa8] sm:$0xf] %v468
          %517 = vst [vmem:[#allocation4 + $0xac] sm:$0xf] %v469
          %518 = vst [vmem:[#allocation4 + $0xb0] sm:$0xf] %v470
          %519 = vst [vmem:[#allocation4 + $0xb4] sm:$0xf] %v471
          %520 = vst [vmem:[#allocation4 + $0xb8] sm:$0xf] %v472
          %521 = vst [vmem:[#allocation4 + $0xbc] sm:$0xf] %v473
        $region44: #{tpu_custom_call.1} parent=23 // pred_fallthru
          _
        %s522 = smul.u32 %s25, 192
        %s523 = scalar_lea.vmem [#allocation3], %s522
        %v524 = vld [vmem:[%s523] sm:$0xff]
        %v525 = vld [vmem:[%s523 + $0x8] sm:$0xff]
        %v526 = vld [vmem:[%s523 + $0x10] sm:$0xff]
        %v527 = vld [vmem:[%s523 + $0x18] sm:$0xff]
        %v528 = vld [vmem:[%s523 + $0x20] sm:$0xff]
        %v529 = vld [vmem:[%s523 + $0x28] sm:$0xff]
        %v530 = vld [vmem:[%s523 + $0x30] sm:$0xff]
        %v531 = vld [vmem:[%s523 + $0x38] sm:$0xff]
        %v532 = vld [vmem:[%s523 + $0x40] sm:$0xff]
        %v533 = vld [vmem:[%s523 + $0x48] sm:$0xff]
        %v534 = vld [vmem:[%s523 + $0x50] sm:$0xff]
        %v535 = vld [vmem:[%s523 + $0x58] sm:$0xff]
        %v536 = vld [vmem:[%s523 + $0x60] sm:$0xff]
        %v537 = vld [vmem:[%s523 + $0x68] sm:$0xff]
        %v538 = vld [vmem:[%s523 + $0x70] sm:$0xff]
        %v539 = vld [vmem:[%s523 + $0x78] sm:$0xff]
        %v540 = vld [vmem:[%s523 + $0x80] sm:$0xff]
        %v541 = vld [vmem:[%s523 + $0x88] sm:$0xff]
        %v542 = vld [vmem:[%s523 + $0x90] sm:$0xff]
        %v543 = vld [vmem:[%s523 + $0x98] sm:$0xff]
        %v544 = vld [vmem:[%s523 + $0xa0] sm:$0xff]
        %v545 = vld [vmem:[%s523 + $0xa8] sm:$0xff]
        %v546 = vld [vmem:[%s523 + $0xb0] sm:$0xff]
        %v547 = vld [vmem:[%s523 + $0xb8] sm:$0xff]
        %s548 = sshra.s32 %s522, 3
        %s549 = sand.u32 %s522, 7
        %s550 = smul.u32 %s548, 3
        %s551 = smul.addr %s550, 4
        %s552 = scalar_lea.vmem [#allocation2], %s551
        %v553 = vld [vmem:[%s552] sm:$0xff]
        %v554 = vld [vmem:[%s552 + $0x8] sm:$0xf]
        %v555 = vld [vmem:[%s552 + $0xc] sm:$0xff]
        %v556 = vld [vmem:[%s552 + $0x14] sm:$0xf]
        %v557 = vld [vmem:[%s552 + $0x18] sm:$0xff]
        %v558 = vld [vmem:[%s552 + $0x20] sm:$0xf]
        %v559 = vld [vmem:[%s552 + $0x24] sm:$0xff]
        %v560 = vld [vmem:[%s552 + $0x2c] sm:$0xf]
        %v561 = vld [vmem:[%s552 + $0x30] sm:$0xff]
        %v562 = vld [vmem:[%s552 + $0x38] sm:$0xf]
        %v563 = vld [vmem:[%s552 + $0x3c] sm:$0xff]
        %v564 = vld [vmem:[%s552 + $0x44] sm:$0xf]
        %v565 = vld [vmem:[%s552 + $0x48] sm:$0xff]
        %v566 = vld [vmem:[%s552 + $0x50] sm:$0xf]
        %v567 = vld [vmem:[%s552 + $0x54] sm:$0xff]
        %v568 = vld [vmem:[%s552 + $0x5c] sm:$0xf]
        %v569 = vld [vmem:[%s552 + $0x60] sm:$0xff]
        %v570 = vld [vmem:[%s552 + $0x68] sm:$0xf]
        %v571 = vld [vmem:[%s552 + $0x6c] sm:$0xff]
        %v572 = vld [vmem:[%s552 + $0x74] sm:$0xf]
        %v573 = vld [vmem:[%s552 + $0x78] sm:$0xff]
        %v574 = vld [vmem:[%s552 + $0x80] sm:$0xf]
        %v575 = vld [vmem:[%s552 + $0x84] sm:$0xff]
        %v576 = vld [vmem:[%s552 + $0x8c] sm:$0xf]
        %v577 = vld [vmem:[%s552 + $0x90] sm:$0xff]
        %v578 = vld [vmem:[%s552 + $0x98] sm:$0xf]
        %v579 = vld [vmem:[%s552 + $0x9c] sm:$0xff]
        %v580 = vld [vmem:[%s552 + $0xa4] sm:$0xf]
        %v581 = vld [vmem:[%s552 + $0xa8] sm:$0xff]
        %v582 = vld [vmem:[%s552 + $0xb0] sm:$0xf]
        %v583 = vld [vmem:[%s552 + $0xb4] sm:$0xff]
        %v584 = vld [vmem:[%s552 + $0xbc] sm:$0xf]
        %v585 = vld [vmem:[%s552 + $0xc0] sm:$0xff]
        %v586 = vld [vmem:[%s552 + $0xc8] sm:$0xf]
        %v587 = vld [vmem:[%s552 + $0xcc] sm:$0xff]
        %v588 = vld [vmem:[%s552 + $0xd4] sm:$0xf]
        %v589 = vld [vmem:[%s552 + $0xd8] sm:$0xff]
        %v590 = vld [vmem:[%s552 + $0xe0] sm:$0xf]
        %v591 = vld [vmem:[%s552 + $0xe4] sm:$0xff]
        %v592 = vld [vmem:[%s552 + $0xec] sm:$0xf]
        %v593 = vld [vmem:[%s552 + $0xf0] sm:$0xff]
        %v594 = vld [vmem:[%s552 + $0xf8] sm:$0xf]
        %v595 = vld [vmem:[%s552 + $0xfc] sm:$0xff]
        %v596 = vld [vmem:[%s552 + $0x104] sm:$0xf]
        %v597 = vld [vmem:[%s552 + $0x108] sm:$0xff]
        %v598 = vld [vmem:[%s552 + $0x110] sm:$0xf]
        %v599 = vld [vmem:[%s552 + $0x114] sm:$0xff]
        %v600 = vld [vmem:[%s552 + $0x11c] sm:$0xf]
        %v601 = vld [vmem:[#allocation4] sm:$0xf]
        %v602 = vld [vmem:[#allocation4 + $0x4] sm:$0xf]
        %v603 = vld [vmem:[#allocation4 + $0x8] sm:$0xf]
        %v604 = vld [vmem:[#allocation4 + $0xc] sm:$0xf]
        %v605 = vld [vmem:[#allocation4 + $0x10] sm:$0xf]
        %v606 = vld [vmem:[#allocation4 + $0x14] sm:$0xf]
        %v607 = vld [vmem:[#allocation4 + $0x18] sm:$0xf]
        %v608 = vld [vmem:[#allocation4 + $0x1c] sm:$0xf]
        %v609 = vld [vmem:[#allocation4 + $0x20] sm:$0xf]
        %v610 = vld [vmem:[#allocation4 + $0x24] sm:$0xf]
        %v611 = vld [vmem:[#allocation4 + $0x28] sm:$0xf]
        %v612 = vld [vmem:[#allocation4 + $0x2c] sm:$0xf]
        %v613 = vld [vmem:[#allocation4 + $0x30] sm:$0xf]
        %v614 = vld [vmem:[#allocation4 + $0x34] sm:$0xf]
        %v615 = vld [vmem:[#allocation4 + $0x38] sm:$0xf]
        %v616 = vld [vmem:[#allocation4 + $0x3c] sm:$0xf]
        %v617 = vld [vmem:[#allocation4 + $0x40] sm:$0xf]
        %v618 = vld [vmem:[#allocation4 + $0x44] sm:$0xf]
        %v619 = vld [vmem:[#allocation4 + $0x48] sm:$0xf]
        %v620 = vld [vmem:[#allocation4 + $0x4c] sm:$0xf]
        %v621 = vld [vmem:[#allocation4 + $0x50] sm:$0xf]
        %v622 = vld [vmem:[#allocation4 + $0x54] sm:$0xf]
        %v623 = vld [vmem:[#allocation4 + $0x58] sm:$0xf]
        %v624 = vld [vmem:[#allocation4 + $0x5c] sm:$0xf]
        %v625 = vld [vmem:[#allocation4 + $0x60] sm:$0xf]
        %v626 = vld [vmem:[#allocation4 + $0x64] sm:$0xf]
        %v627 = vld [vmem:[#allocation4 + $0x68] sm:$0xf]
        %v628 = vld [vmem:[#allocation4 + $0x6c] sm:$0xf]
        %v629 = vld [vmem:[#allocation4 + $0x70] sm:$0xf]
        %v630 = vld [vmem:[#allocation4 + $0x74] sm:$0xf]
        %v631 = vld [vmem:[#allocation4 + $0x78] sm:$0xf]
        %v632 = vld [vmem:[#allocation4 + $0x7c] sm:$0xf]
        %v633 = vld [vmem:[#allocation4 + $0x80] sm:$0xf]
        %v634 = vld [vmem:[#allocation4 + $0x84] sm:$0xf]
        %v635 = vld [vmem:[#allocation4 + $0x88] sm:$0xf]
        %v636 = vld [vmem:[#allocation4 + $0x8c] sm:$0xf]
        %v637 = vld [vmem:[#allocation4 + $0x90] sm:$0xf]
        %v638 = vld [vmem:[#allocation4 + $0x94] sm:$0xf]
        %v639 = vld [vmem:[#allocation4 + $0x98] sm:$0xf]
        %v640 = vld [vmem:[#allocation4 + $0x9c] sm:$0xf]
        %v641 = vld [vmem:[#allocation4 + $0xa0] sm:$0xf]
        %v642 = vld [vmem:[#allocation4 + $0xa4] sm:$0xf]
        %v643 = vld [vmem:[#allocation4 + $0xa8] sm:$0xf]
        %v644 = vld [vmem:[#allocation4 + $0xac] sm:$0xf]
        %v645 = vld [vmem:[#allocation4 + $0xb0] sm:$0xf]
        %v646 = vld [vmem:[#allocation4 + $0xb4] sm:$0xf]
        %v647 = vld [vmem:[#allocation4 + $0xb8] sm:$0xf]
        %v648 = vld [vmem:[#allocation4 + $0xbc] sm:$0xf]
        %v697 = vunpack.c.l.b16 %v553
        %v698 = vunpack.c.h.b16 %v553
        %v699 = vunpack.c.l.b16 %v554
        %v700 = vunpack.c.l.b16 %v555
        %v701 = vunpack.c.h.b16 %v555
        %v702 = vunpack.c.l.b16 %v556
        %v703 = vunpack.c.l.b16 %v557
        %v704 = vunpack.c.h.b16 %v557
        %v705 = vunpack.c.l.b16 %v558
        %v706 = vunpack.c.l.b16 %v559
        %v707 = vunpack.c.h.b16 %v559
        %v708 = vunpack.c.l.b16 %v560
        %v709 = vunpack.c.l.b16 %v561
        %v710 = vunpack.c.h.b16 %v561
        %v711 = vunpack.c.l.b16 %v562
        %v712 = vunpack.c.l.b16 %v563
        %v713 = vunpack.c.h.b16 %v563
        %v714 = vunpack.c.l.b16 %v564
        %v715 = vunpack.c.l.b16 %v565
        %v716 = vunpack.c.h.b16 %v565
        %v717 = vunpack.c.l.b16 %v566
        %v718 = vunpack.c.l.b16 %v567
        %v719 = vunpack.c.h.b16 %v567
        %v720 = vunpack.c.l.b16 %v568
        %v721 = vunpack.c.l.b16 %v569
        %v722 = vunpack.c.h.b16 %v569
        %v723 = vunpack.c.l.b16 %v570
        %v724 = vunpack.c.l.b16 %v571
        %v725 = vunpack.c.h.b16 %v571
        %v726 = vunpack.c.l.b16 %v572
        %v727 = vunpack.c.l.b16 %v573
        %v728 = vunpack.c.h.b16 %v573
        %v729 = vunpack.c.l.b16 %v574
        %v730 = vunpack.c.l.b16 %v575
        %v731 = vunpack.c.h.b16 %v575
        %v732 = vunpack.c.l.b16 %v576
        %v733 = vunpack.c.l.b16 %v577
        %v734 = vunpack.c.h.b16 %v577
        %v735 = vunpack.c.l.b16 %v578
        %v736 = vunpack.c.l.b16 %v579
        %v737 = vunpack.c.h.b16 %v579
        %v738 = vunpack.c.l.b16 %v580
        %v739 = vunpack.c.l.b16 %v581
        %v740 = vunpack.c.h.b16 %v581
        %v741 = vunpack.c.l.b16 %v582
        %v742 = vunpack.c.l.b16 %v583
        %v743 = vunpack.c.h.b16 %v583
        %v744 = vunpack.c.l.b16 %v584
        %v745 = vunpack.c.l.b16 %v585
        %v746 = vunpack.c.h.b16 %v585
        %v747 = vunpack.c.l.b16 %v586
        %v748 = vunpack.c.l.b16 %v587
        %v749 = vunpack.c.h.b16 %v587
        %v750 = vunpack.c.l.b16 %v588
        %v751 = vunpack.c.l.b16 %v589
        %v752 = vunpack.c.h.b16 %v589
        %v753 = vunpack.c.l.b16 %v590
        %v754 = vunpack.c.l.b16 %v591
        %v755 = vunpack.c.h.b16 %v591
        %v756 = vunpack.c.l.b16 %v592
        %v757 = vunpack.c.l.b16 %v593
        %v758 = vunpack.c.h.b16 %v593
        %v759 = vunpack.c.l.b16 %v594
        %v760 = vunpack.c.l.b16 %v595
        %v761 = vunpack.c.h.b16 %v595
        %v762 = vunpack.c.l.b16 %v596
        %v763 = vunpack.c.l.b16 %v597
        %v764 = vunpack.c.h.b16 %v597
        %v765 = vunpack.c.l.b16 %v598
        %v766 = vunpack.c.l.b16 %v599
        %v767 = vunpack.c.h.b16 %v599
        %v768 = vunpack.c.l.b16 %v600
        %v769 = vpack.c.b16 %v700, %v697
        %v770 = vpack.c.b16 %v701, %v698
        %v771 = vpack.c.b16 %v702, %v699
        %v772 = vpack.c.b16 %v706, %v703
        %v773 = vpack.c.b16 %v707, %v704
        %v774 = vpack.c.b16 %v708, %v705
        %v775 = vpack.c.b16 %v712, %v709
        %v776 = vpack.c.b16 %v713, %v710
        %v777 = vpack.c.b16 %v714, %v711
        %v778 = vpack.c.b16 %v718, %v715
        %v779 = vpack.c.b16 %v719, %v716
        %v780 = vpack.c.b16 %v720, %v717
        %v781 = vpack.c.b16 %v724, %v721
        %v782 = vpack.c.b16 %v725, %v722
        %v783 = vpack.c.b16 %v726, %v723
        %v784 = vpack.c.b16 %v730, %v727
        %v785 = vpack.c.b16 %v731, %v728
        %v786 = vpack.c.b16 %v732, %v729
        %v787 = vpack.c.b16 %v736, %v733
        %v788 = vpack.c.b16 %v737, %v734
        %v789 = vpack.c.b16 %v738, %v735
        %v790 = vpack.c.b16 %v742, %v739
        %v791 = vpack.c.b16 %v743, %v740
        %v792 = vpack.c.b16 %v744, %v741
        %v793 = vpack.c.b16 %v748, %v745
        %v794 = vpack.c.b16 %v749, %v746
        %v795 = vpack.c.b16 %v750, %v747
        %v796 = vpack.c.b16 %v754, %v751
        %v797 = vpack.c.b16 %v755, %v752
        %v798 = vpack.c.b16 %v756, %v753
        %v799 = vpack.c.b16 %v760, %v757
        %v800 = vpack.c.b16 %v761, %v758
        %v801 = vpack.c.b16 %v762, %v759
        %v802 = vpack.c.b16 %v766, %v763
        %v803 = vpack.c.b16 %v767, %v764
        %v804 = vpack.c.b16 %v768, %v765
        %v889 = vunpack.c.l.b16 %v601
        %v890 = vunpack.c.l.b16 %v602
        %v891 = vunpack.c.l.b16 %v603
        %v892 = vunpack.c.l.b16 %v604
        %v893 = vunpack.c.l.b16 %v605
        %v894 = vunpack.c.l.b16 %v606
        %v895 = vunpack.c.l.b16 %v607
        %v896 = vunpack.c.l.b16 %v608
        %v897 = vunpack.c.l.b16 %v609
        %v898 = vunpack.c.l.b16 %v610
        %v899 = vunpack.c.l.b16 %v611
        %v900 = vunpack.c.l.b16 %v612
        %v901 = vunpack.c.l.b16 %v613
        %v902 = vunpack.c.l.b16 %v614
        %v903 = vunpack.c.l.b16 %v615
        %v904 = vunpack.c.l.b16 %v616
        %v905 = vunpack.c.l.b16 %v617
        %v906 = vunpack.c.l.b16 %v618
        %v907 = vunpack.c.l.b16 %v619
        %v908 = vunpack.c.l.b16 %v620
        %v909 = vunpack.c.l.b16 %v621
        %v910 = vunpack.c.l.b16 %v622
        %v911 = vunpack.c.l.b16 %v623
        %v912 = vunpack.c.l.b16 %v624
        %v913 = vunpack.c.l.b16 %v625
        %v914 = vunpack.c.l.b16 %v626
        %v915 = vunpack.c.l.b16 %v627
        %v916 = vunpack.c.l.b16 %v628
        %v917 = vunpack.c.l.b16 %v629
        %v918 = vunpack.c.l.b16 %v630
        %v919 = vunpack.c.l.b16 %v631
        %v920 = vunpack.c.l.b16 %v632
        %v921 = vunpack.c.l.b16 %v633
        %v922 = vunpack.c.l.b16 %v634
        %v923 = vunpack.c.l.b16 %v635
        %v924 = vunpack.c.l.b16 %v636
        %v925 = vunpack.c.l.b16 %v637
        %v926 = vunpack.c.l.b16 %v638
        %v927 = vunpack.c.l.b16 %v639
        %v928 = vunpack.c.l.b16 %v640
        %v929 = vunpack.c.l.b16 %v641
        %v930 = vunpack.c.l.b16 %v642
        %v931 = vunpack.c.l.b16 %v643
        %v932 = vunpack.c.l.b16 %v644
        %v933 = vunpack.c.l.b16 %v645
        %v934 = vunpack.c.l.b16 %v646
        %v935 = vunpack.c.l.b16 %v647
        %v936 = vunpack.c.l.b16 %v648
        %v937 = vpack.c.b16 %v890, %v889
        %v938 = vpack.c.b16 %v892, %v891
        %v939 = vpack.c.b16 %v894, %v893
        %v940 = vpack.c.b16 %v896, %v895
        %v941 = vpack.c.b16 %v898, %v897
        %v942 = vpack.c.b16 %v900, %v899
        %v943 = vpack.c.b16 %v902, %v901
        %v944 = vpack.c.b16 %v904, %v903
        %v945 = vpack.c.b16 %v906, %v905
        %v946 = vpack.c.b16 %v908, %v907
        %v947 = vpack.c.b16 %v910, %v909
        %v948 = vpack.c.b16 %v912, %v911
        %v949 = vpack.c.b16 %v914, %v913
        %v950 = vpack.c.b16 %v916, %v915
        %v951 = vpack.c.b16 %v918, %v917
        %v952 = vpack.c.b16 %v920, %v919
        %v953 = vpack.c.b16 %v922, %v921
        %v954 = vpack.c.b16 %v924, %v923
        %v955 = vpack.c.b16 %v926, %v925
        %v956 = vpack.c.b16 %v928, %v927
        %v957 = vpack.c.b16 %v930, %v929
        %v958 = vpack.c.b16 %v932, %v931
        %v959 = vpack.c.b16 %v934, %v933
        %v960 = vpack.c.b16 %v936, %v935
        %985 = vmatpush.bf16.msra.mxu0 %v944
        %986 = vmatpush.bf16.msra.mxu0 %v943
        %987 = vmatpush.bf16.msra.mxu0 %v942
        %988 = vmatpush.bf16.msra.mxu0 %v941
        %989 = vmatpush.bf16.msra.mxu0 %v940
        %990 = vmatpush.bf16.msra.mxu0 %v939
        %991 = vmatpush.bf16.msra.mxu0 %v938
        %992 = vmatpush.bf16.msra.mxu0 %v937
        %993 = vmatmul.bf16.gmra.mxu0 %v769
        %v994 = vpop.f32.mrf.mxu0
        %v995 = vadd.f32 0.0, %v994
        %v996 = vpop.f32.mrf.mxu0
        %v997 = vadd.f32 0.0, %v996
        %998 = vmatmul.bf16.gmra.mxu0 %v772
        %v999 = vpop.f32.mrf.mxu0
        %v1000 = vadd.f32 0.0, %v999
        %v1001 = vpop.f32.mrf.mxu0
        %v1002 = vadd.f32 0.0, %v1001
        %1003 = vmatmul.bf16.gmra.mxu0 %v775
        %v1004 = vpop.f32.mrf.mxu0
        %v1005 = vadd.f32 0.0, %v1004
        %v1006 = vpop.f32.mrf.mxu0
        %v1007 = vadd.f32 0.0, %v1006
        %1008 = vmatmul.bf16.gmra.mxu0 %v778
        %v1009 = vpop.f32.mrf.mxu0
        %v1010 = vadd.f32 0.0, %v1009
        %v1011 = vpop.f32.mrf.mxu0
        %v1012 = vadd.f32 0.0, %v1011
        %1013 = vmatmul.bf16.gmra.mxu0 %v781
        %v1014 = vpop.f32.mrf.mxu0
        %v1015 = vadd.f32 0.0, %v1014
        %v1016 = vpop.f32.mrf.mxu0
        %v1017 = vadd.f32 0.0, %v1016
        %1018 = vmatmul.bf16.gmra.mxu0 %v784
        %v1019 = vpop.f32.mrf.mxu0
        %v1020 = vadd.f32 0.0, %v1019
        %v1021 = vpop.f32.mrf.mxu0
        %v1022 = vadd.f32 0.0, %v1021
        %1023 = vmatmul.bf16.gmra.mxu0 %v787
        %v1024 = vpop.f32.mrf.mxu0
        %v1025 = vadd.f32 0.0, %v1024
        %v1026 = vpop.f32.mrf.mxu0
        %v1027 = vadd.f32 0.0, %v1026
        %1028 = vmatmul.bf16.gmra.mxu0 %v790
        %v1029 = vpop.f32.mrf.mxu0
        %v1030 = vadd.f32 0.0, %v1029
        %v1031 = vpop.f32.mrf.mxu0
        %v1032 = vadd.f32 0.0, %v1031
        %1033 = vmatmul.bf16.gmra.mxu0 %v793
        %v1034 = vpop.f32.mrf.mxu0
        %v1035 = vadd.f32 0.0, %v1034
        %v1036 = vpop.f32.mrf.mxu0
        %v1037 = vadd.f32 0.0, %v1036
        %1038 = vmatmul.bf16.gmra.mxu0 %v796
        %v1039 = vpop.f32.mrf.mxu0
        %v1040 = vadd.f32 0.0, %v1039
        %v1041 = vpop.f32.mrf.mxu0
        %v1042 = vadd.f32 0.0, %v1041
        %1043 = vmatmul.bf16.gmra.mxu0 %v799
        %v1044 = vpop.f32.mrf.mxu0
        %v1045 = vadd.f32 0.0, %v1044
        %v1046 = vpop.f32.mrf.mxu0
        %v1047 = vadd.f32 0.0, %v1046
        %1048 = vmatmul.bf16.gmra.mxu0 %v802
        %v1049 = vpop.f32.mrf.mxu0
        %v1050 = vadd.f32 0.0, %v1049
        %v1051 = vpop.f32.mrf.mxu0
        %v1052 = vadd.f32 0.0, %v1051
        %1053 = vdwg.mxu0
        %1054 = vmatpush.bf16.msra.mxu0 %v952
        %1055 = vmatpush.bf16.msra.mxu0 %v951
        %1056 = vmatpush.bf16.msra.mxu0 %v950
        %1057 = vmatpush.bf16.msra.mxu0 %v949
        %1058 = vmatpush.bf16.msra.mxu0 %v948
        %1059 = vmatpush.bf16.msra.mxu0 %v947
        %1060 = vmatpush.bf16.msra.mxu0 %v946
        %1061 = vmatpush.bf16.msra.mxu0 %v945
        %1062 = vmatmul.bf16.gmra.mxu0 %v770
        %v1063 = vpop.f32.mrf.mxu0
        %v1064 = vadd.f32 %v995, %v1063
        %v1065 = vpop.f32.mrf.mxu0
        %v1066 = vadd.f32 %v997, %v1065
        %1067 = vmatmul.bf16.gmra.mxu0 %v773
        %v1068 = vpop.f32.mrf.mxu0
        %v1069 = vadd.f32 %v1000, %v1068
        %v1070 = vpop.f32.mrf.mxu0
        %v1071 = vadd.f32 %v1002, %v1070
        %1072 = vmatmul.bf16.gmra.mxu0 %v776
        %v1073 = vpop.f32.mrf.mxu0
        %v1074 = vadd.f32 %v1005, %v1073
        %v1075 = vpop.f32.mrf.mxu0
        %v1076 = vadd.f32 %v1007, %v1075
        %1077 = vmatmul.bf16.gmra.mxu0 %v779
        %v1078 = vpop.f32.mrf.mxu0
        %v1079 = vadd.f32 %v1010, %v1078
        %v1080 = vpop.f32.mrf.mxu0
        %v1081 = vadd.f32 %v1012, %v1080
        %1082 = vmatmul.bf16.gmra.mxu0 %v782
        %v1083 = vpop.f32.mrf.mxu0
        %v1084 = vadd.f32 %v1015, %v1083
        %v1085 = vpop.f32.mrf.mxu0
        %v1086 = vadd.f32 %v1017, %v1085
        %1087 = vmatmul.bf16.gmra.mxu0 %v785
        %v1088 = vpop.f32.mrf.mxu0
        %v1089 = vadd.f32 %v1020, %v1088
        %v1090 = vpop.f32.mrf.mxu0
        %v1091 = vadd.f32 %v1022, %v1090
        %1092 = vmatmul.bf16.gmra.mxu0 %v788
        %v1093 = vpop.f32.mrf.mxu0
        %v1094 = vadd.f32 %v1025, %v1093
        %v1095 = vpop.f32.mrf.mxu0
        %v1096 = vadd.f32 %v1027, %v1095
        %1097 = vmatmul.bf16.gmra.mxu0 %v791
        %v1098 = vpop.f32.mrf.mxu0
        %v1099 = vadd.f32 %v1030, %v1098
        %v1100 = vpop.f32.mrf.mxu0
        %v1101 = vadd.f32 %v1032, %v1100
        %1102 = vmatmul.bf16.gmra.mxu0 %v794
        %v1103 = vpop.f32.mrf.mxu0
        %v1104 = vadd.f32 %v1035, %v1103
        %v1105 = vpop.f32.mrf.mxu0
        %v1106 = vadd.f32 %v1037, %v1105
        %1107 = vmatmul.bf16.gmra.mxu0 %v797
        %v1108 = vpop.f32.mrf.mxu0
        %v1109 = vadd.f32 %v1040, %v1108
        %v1110 = vpop.f32.mrf.mxu0
        %v1111 = vadd.f32 %v1042, %v1110
        %1112 = vmatmul.bf16.gmra.mxu0 %v800
        %v1113 = vpop.f32.mrf.mxu0
        %v1114 = vadd.f32 %v1045, %v1113
        %v1115 = vpop.f32.mrf.mxu0
        %v1116 = vadd.f32 %v1047, %v1115
        %1117 = vmatmul.bf16.gmra.mxu0 %v803
        %v1118 = vpop.f32.mrf.mxu0
        %v1119 = vadd.f32 %v1050, %v1118
        %v1120 = vpop.f32.mrf.mxu0
        %v1121 = vadd.f32 %v1052, %v1120
        %1122 = vdwg.mxu0
        %1123 = vmatpush.bf16.msra.mxu0 %v960
        %1124 = vmatpush.bf16.msra.mxu0 %v959
        %1125 = vmatpush.bf16.msra.mxu0 %v958
        %1126 = vmatpush.bf16.msra.mxu0 %v957
        %1127 = vmatpush.bf16.msra.mxu0 %v956
        %1128 = vmatpush.bf16.msra.mxu0 %v955
        %1129 = vmatpush.bf16.msra.mxu0 %v954
        %1130 = vmatpush.bf16.msra.mxu0 %v953
        %1131 = vmatmul.bf16.gmra.mxu0 %v771
        %v1132 = vpop.f32.mrf.mxu0
        %v1133 = vadd.f32 %v1064, %v1132
        %v1134 = vpop.f32.mrf.mxu0
        %v1135 = vadd.f32 %v1066, %v1134
        %1136 = vmatmul.bf16.gmra.mxu0 %v774
        %v1137 = vpop.f32.mrf.mxu0
        %v1138 = vadd.f32 %v1069, %v1137
        %v1139 = vpop.f32.mrf.mxu0
        %v1140 = vadd.f32 %v1071, %v1139
        %1141 = vmatmul.bf16.gmra.mxu0 %v777
        %v1142 = vpop.f32.mrf.mxu0
        %v1143 = vadd.f32 %v1074, %v1142
        %v1144 = vpop.f32.mrf.mxu0
        %v1145 = vadd.f32 %v1076, %v1144
        %1146 = vmatmul.bf16.gmra.mxu0 %v780
        %v1147 = vpop.f32.mrf.mxu0
        %v1148 = vadd.f32 %v1079, %v1147
        %v1149 = vpop.f32.mrf.mxu0
        %v1150 = vadd.f32 %v1081, %v1149
        %1151 = vmatmul.bf16.gmra.mxu0 %v783
        %v1152 = vpop.f32.mrf.mxu0
        %v1153 = vadd.f32 %v1084, %v1152
        %v1154 = vpop.f32.mrf.mxu0
        %v1155 = vadd.f32 %v1086, %v1154
        %1156 = vmatmul.bf16.gmra.mxu0 %v786
        %v1157 = vpop.f32.mrf.mxu0
        %v1158 = vadd.f32 %v1089, %v1157
        %v1159 = vpop.f32.mrf.mxu0
        %v1160 = vadd.f32 %v1091, %v1159
        %1161 = vmatmul.bf16.gmra.mxu0 %v789
        %v1162 = vpop.f32.mrf.mxu0
        %v1163 = vadd.f32 %v1094, %v1162
        %v1164 = vpop.f32.mrf.mxu0
        %v1165 = vadd.f32 %v1096, %v1164
        %1166 = vmatmul.bf16.gmra.mxu0 %v792
        %v1167 = vpop.f32.mrf.mxu0
        %v1168 = vadd.f32 %v1099, %v1167
        %v1169 = vpop.f32.mrf.mxu0
        %v1170 = vadd.f32 %v1101, %v1169
        %1171 = vmatmul.bf16.gmra.mxu0 %v795
        %v1172 = vpop.f32.mrf.mxu0
        %v1173 = vadd.f32 %v1104, %v1172
        %v1174 = vpop.f32.mrf.mxu0
        %v1175 = vadd.f32 %v1106, %v1174
        %1176 = vmatmul.bf16.gmra.mxu0 %v798
        %v1177 = vpop.f32.mrf.mxu0
        %v1178 = vadd.f32 %v1109, %v1177
        %v1179 = vpop.f32.mrf.mxu0
        %v1180 = vadd.f32 %v1111, %v1179
        %1181 = vmatmul.bf16.gmra.mxu0 %v801
        %v1182 = vpop.f32.mrf.mxu0
        %v1183 = vadd.f32 %v1114, %v1182
        %v1184 = vpop.f32.mrf.mxu0
        %v1185 = vadd.f32 %v1116, %v1184
        %1186 = vmatmul.bf16.gmra.mxu0 %v804
        %v1187 = vpop.f32.mrf.mxu0
        %v1188 = vadd.f32 %v1119, %v1187
        %v1189 = vpop.f32.mrf.mxu0
        %v1190 = vadd.f32 %v1121, %v1189
        %1191 = vdwg.mxu0
        %v1192 = vmax.f32 %v1133, 0.0
        %v1193 = vmax.f32 %v1135, 0.0
        %v1194 = vmax.f32 %v1138, 0.0
        %v1195 = vmax.f32 %v1140, 0.0
        %v1196 = vmax.f32 %v1143, 0.0
        %v1197 = vmax.f32 %v1145, 0.0
        %v1198 = vmax.f32 %v1148, 0.0
        %v1199 = vmax.f32 %v1150, 0.0
        %v1200 = vmax.f32 %v1153, 0.0
        %v1201 = vmax.f32 %v1155, 0.0
        %v1202 = vmax.f32 %v1158, 0.0
        %v1203 = vmax.f32 %v1160, 0.0
        %v1204 = vmax.f32 %v1163, 0.0
        %v1205 = vmax.f32 %v1165, 0.0
        %v1206 = vmax.f32 %v1168, 0.0
        %v1207 = vmax.f32 %v1170, 0.0
        %v1208 = vmax.f32 %v1173, 0.0
        %v1209 = vmax.f32 %v1175, 0.0
        %v1210 = vmax.f32 %v1178, 0.0
        %v1211 = vmax.f32 %v1180, 0.0
        %v1212 = vmax.f32 %v1183, 0.0
        %v1213 = vmax.f32 %v1185, 0.0
        %v1214 = vmax.f32 %v1188, 0.0
        %v1215 = vmax.f32 %v1190, 0.0
        %v1216 = vadd.f32 %v524, %v1192
        %v1217 = vadd.f32 %v525, %v1193
        %v1218 = vadd.f32 %v526, %v1194
        %v1219 = vadd.f32 %v527, %v1195
        %v1220 = vadd.f32 %v528, %v1196
        %v1221 = vadd.f32 %v529, %v1197
        %v1222 = vadd.f32 %v530, %v1198
        %v1223 = vadd.f32 %v531, %v1199
        %v1224 = vadd.f32 %v532, %v1200
        %v1225 = vadd.f32 %v533, %v1201
        %v1226 = vadd.f32 %v534, %v1202
        %v1227 = vadd.f32 %v535, %v1203
        %v1228 = vadd.f32 %v536, %v1204
        %v1229 = vadd.f32 %v537, %v1205
        %v1230 = vadd.f32 %v538, %v1206
        %v1231 = vadd.f32 %v539, %v1207
        %v1232 = vadd.f32 %v540, %v1208
        %v1233 = vadd.f32 %v541, %v1209
        %v1234 = vadd.f32 %v542, %v1210
        %v1235 = vadd.f32 %v543, %v1211
        %v1236 = vadd.f32 %v544, %v1212
        %v1237 = vadd.f32 %v545, %v1213
        %v1238 = vadd.f32 %v546, %v1214
        %v1239 = vadd.f32 %v547, %v1215
        %1240 = vst [vmem:[%s523] sm:$0xff] %v1216
        %1241 = vst [vmem:[%s523 + $0x8] sm:$0xff] %v1217
        %1242 = vst [vmem:[%s523 + $0x10] sm:$0xff] %v1218
        %1243 = vst [vmem:[%s523 + $0x18] sm:$0xff] %v1219
        %1244 = vst [vmem:[%s523 + $0x20] sm:$0xff] %v1220
        %1245 = vst [vmem:[%s523 + $0x28] sm:$0xff] %v1221
        %1246 = vst [vmem:[%s523 + $0x30] sm:$0xff] %v1222
        %1247 = vst [vmem:[%s523 + $0x38] sm:$0xff] %v1223
        %1248 = vst [vmem:[%s523 + $0x40] sm:$0xff] %v1224
        %1249 = vst [vmem:[%s523 + $0x48] sm:$0xff] %v1225
        %1250 = vst [vmem:[%s523 + $0x50] sm:$0xff] %v1226
        %1251 = vst [vmem:[%s523 + $0x58] sm:$0xff] %v1227
        %1252 = vst [vmem:[%s523 + $0x60] sm:$0xff] %v1228
        %1253 = vst [vmem:[%s523 + $0x68] sm:$0xff] %v1229
        %1254 = vst [vmem:[%s523 + $0x70] sm:$0xff] %v1230
        %1255 = vst [vmem:[%s523 + $0x78] sm:$0xff] %v1231
        %1256 = vst [vmem:[%s523 + $0x80] sm:$0xff] %v1232
        %1257 = vst [vmem:[%s523 + $0x88] sm:$0xff] %v1233
        %1258 = vst [vmem:[%s523 + $0x90] sm:$0xff] %v1234
        %1259 = vst [vmem:[%s523 + $0x98] sm:$0xff] %v1235
        %1260 = vst [vmem:[%s523 + $0xa0] sm:$0xff] %v1236
        %1261 = vst [vmem:[%s523 + $0xa8] sm:$0xff] %v1237
        %1262 = vst [vmem:[%s523 + $0xb0] sm:$0xff] %v1238
        %1263 = vst [vmem:[%s523 + $0xb8] sm:$0xff] %v1239
        %p1264 = scmp.eq.s32.totalorder %s24, 2
        // Predicated region
        $region45: #{tpu_custom_call.1} parent=23 // pred_check
          %p1265 = pneg %p1264
        $region46: #{tpu_custom_call.1} parent=23 // pred_check_branch
          %1267 = sbr.rel (%p1265) target = $region48
        $region47: #{tpu_custom_call.1} parent=23 // pred_region
          %v1268 = vmul.f32 %v1216, %v1216
          %v1269 = vmul.f32 %v1217, %v1217
          %v1270 = vmul.f32 %v1218, %v1218
          %v1271 = vmul.f32 %v1219, %v1219
          %v1272 = vmul.f32 %v1220, %v1220
          %v1273 = vmul.f32 %v1221, %v1221
          %v1274 = vmul.f32 %v1222, %v1222
          %v1275 = vmul.f32 %v1223, %v1223
          %v1276 = vmul.f32 %v1224, %v1224
          %v1277 = vmul.f32 %v1225, %v1225
          %v1278 = vmul.f32 %v1226, %v1226
          %v1279 = vmul.f32 %v1227, %v1227
          %v1280 = vmul.f32 %v1228, %v1228
          %v1281 = vmul.f32 %v1229, %v1229
          %v1282 = vmul.f32 %v1230, %v1230
          %v1283 = vmul.f32 %v1231, %v1231
          %v1284 = vmul.f32 %v1232, %v1232
          %v1285 = vmul.f32 %v1233, %v1233
          %v1286 = vmul.f32 %v1234, %v1234
          %v1287 = vmul.f32 %v1235, %v1235
          %v1288 = vmul.f32 %v1236, %v1236
          %v1289 = vmul.f32 %v1237, %v1237
          %v1290 = vmul.f32 %v1238, %v1238
          %v1291 = vmul.f32 %v1239, %v1239
          %1292 = vadd.xlane.f32.xlu0 %v1268
          %v1293 = vpop.xlane.xlu0 %1292
          %1294 = vadd.xlane.f32.xlu0 %v1269
          %v1295 = vpop.xlane.xlu0 %1294
          %1296 = vadd.xlane.f32.xlu0 %v1270
          %v1297 = vpop.xlane.xlu0 %1296
          %1298 = vadd.xlane.f32.xlu0 %v1271
          %v1299 = vpop.xlane.xlu0 %1298
          %1300 = vadd.xlane.f32.xlu0 %v1272
          %v1301 = vpop.xlane.xlu0 %1300
          %1302 = vadd.xlane.f32.xlu0 %v1273
          %v1303 = vpop.xlane.xlu0 %1302
          %1304 = vadd.xlane.f32.xlu0 %v1274
          %v1305 = vpop.xlane.xlu0 %1304
          %1306 = vadd.xlane.f32.xlu0 %v1275
          %v1307 = vpop.xlane.xlu0 %1306
          %1308 = vadd.xlane.f32.xlu0 %v1276
          %v1309 = vpop.xlane.xlu0 %1308
          %1310 = vadd.xlane.f32.xlu0 %v1277
          %v1311 = vpop.xlane.xlu0 %1310
          %1312 = vadd.xlane.f32.xlu0 %v1278
          %v1313 = vpop.xlane.xlu0 %1312
          %1314 = vadd.xlane.f32.xlu0 %v1279
          %v1315 = vpop.xlane.xlu0 %1314
          %1316 = vadd.xlane.f32.xlu0 %v1280
          %v1317 = vpop.xlane.xlu0 %1316
          %1318 = vadd.xlane.f32.xlu0 %v1281
          %v1319 = vpop.xlane.xlu0 %1318
          %1320 = vadd.xlane.f32.xlu0 %v1282
          %v1321 = vpop.xlane.xlu0 %1320
          %1322 = vadd.xlane.f32.xlu0 %v1283
          %v1323 = vpop.xlane.xlu0 %1322
          %1324 = vadd.xlane.f32.xlu0 %v1284
          %v1325 = vpop.xlane.xlu0 %1324
          %1326 = vadd.xlane.f32.xlu0 %v1285
          %v1327 = vpop.xlane.xlu0 %1326
          %1328 = vadd.xlane.f32.xlu0 %v1286
          %v1329 = vpop.xlane.xlu0 %1328
          %1330 = vadd.xlane.f32.xlu0 %v1287
          %v1331 = vpop.xlane.xlu0 %1330
          %1332 = vadd.xlane.f32.xlu0 %v1288
          %v1333 = vpop.xlane.xlu0 %1332
          %1334 = vadd.xlane.f32.xlu0 %v1289
          %v1335 = vpop.xlane.xlu0 %1334
          %1336 = vadd.xlane.f32.xlu0 %v1290
          %v1337 = vpop.xlane.xlu0 %1336
          %1338 = vadd.xlane.f32.xlu0 %v1291
          %v1339 = vpop.xlane.xlu0 %1338
          %v1340 = vmax.f32 %v1293, 1e-24
          %v1341 = vmax.f32 %v1295, 1e-24
          %v1342 = vmax.f32 %v1297, 1e-24
          %v1343 = vmax.f32 %v1299, 1e-24
          %v1344 = vmax.f32 %v1301, 1e-24
          %v1345 = vmax.f32 %v1303, 1e-24
          %v1346 = vmax.f32 %v1305, 1e-24
          %v1347 = vmax.f32 %v1307, 1e-24
          %v1348 = vmax.f32 %v1309, 1e-24
          %v1349 = vmax.f32 %v1311, 1e-24
          %v1350 = vmax.f32 %v1313, 1e-24
          %v1351 = vmax.f32 %v1315, 1e-24
          %v1352 = vmax.f32 %v1317, 1e-24
          %v1353 = vmax.f32 %v1319, 1e-24
          %v1354 = vmax.f32 %v1321, 1e-24
          %v1355 = vmax.f32 %v1323, 1e-24
          %v1356 = vmax.f32 %v1325, 1e-24
          %v1357 = vmax.f32 %v1327, 1e-24
          %v1358 = vmax.f32 %v1329, 1e-24
          %v1359 = vmax.f32 %v1331, 1e-24
          %v1360 = vmax.f32 %v1333, 1e-24
          %v1361 = vmax.f32 %v1335, 1e-24
          %v1362 = vmax.f32 %v1337, 1e-24
          %v1363 = vmax.f32 %v1339, 1e-24
          %v1364 = vrsqrt.pop %v1340
          %v1365 = vmul.f32 %v1364, %v1340
          %v1366 = vmul.f32 %v1365, %v1364
          %v1367 = vmul.f32 0.5, %v1366
          %v1368 = vsub.f32 1.5, %v1367
          %v1369 = vmul.f32 %v1364, %v1368
          %vm1370 = vweird.f32 %v1340
          %vm1371 = vweird.f32 %v1364
          %vm1372 = vmor %vm1370, %vm1371
          %v1373 = vsel %vm1372, %v1364, %v1369
          %v1374 = vrsqrt.pop %v1341
          %v1375 = vmul.f32 %v1374, %v1341
          %v1376 = vmul.f32 %v1375, %v1374
          %v1377 = vmul.f32 0.5, %v1376
          %v1378 = vsub.f32 1.5, %v1377
          %v1379 = vmul.f32 %v1374, %v1378
          %vm1380 = vweird.f32 %v1341
          %vm1381 = vweird.f32 %v1374
          %vm1382 = vmor %vm1380, %vm1381
          %v1383 = vsel %vm1382, %v1374, %v1379
          %v1384 = vrsqrt.pop %v1342
          %v1385 = vmul.f32 %v1384, %v1342
          %v1386 = vmul.f32 %v1385, %v1384
          %v1387 = vmul.f32 0.5, %v1386
          %v1388 = vsub.f32 1.5, %v1387
          %v1389 = vmul.f32 %v1384, %v1388
          %vm1390 = vweird.f32 %v1342
          %vm1391 = vweird.f32 %v1384
          %vm1392 = vmor %vm1390, %vm1391
          %v1393 = vsel %vm1392, %v1384, %v1389
          %v1394 = vrsqrt.pop %v1343
          %v1395 = vmul.f32 %v1394, %v1343
          %v1396 = vmul.f32 %v1395, %v1394
          %v1397 = vmul.f32 0.5, %v1396
          %v1398 = vsub.f32 1.5, %v1397
          %v1399 = vmul.f32 %v1394, %v1398
          %vm1400 = vweird.f32 %v1343
          %vm1401 = vweird.f32 %v1394
          %vm1402 = vmor %vm1400, %vm1401
          %v1403 = vsel %vm1402, %v1394, %v1399
          %v1404 = vrsqrt.pop %v1344
          %v1405 = vmul.f32 %v1404, %v1344
          %v1406 = vmul.f32 %v1405, %v1404
          %v1407 = vmul.f32 0.5, %v1406
          %v1408 = vsub.f32 1.5, %v1407
          %v1409 = vmul.f32 %v1404, %v1408
          %vm1410 = vweird.f32 %v1344
          %vm1411 = vweird.f32 %v1404
          %vm1412 = vmor %vm1410, %vm1411
          %v1413 = vsel %vm1412, %v1404, %v1409
          %v1414 = vrsqrt.pop %v1345
          %v1415 = vmul.f32 %v1414, %v1345
          %v1416 = vmul.f32 %v1415, %v1414
          %v1417 = vmul.f32 0.5, %v1416
          %v1418 = vsub.f32 1.5, %v1417
          %v1419 = vmul.f32 %v1414, %v1418
          %vm1420 = vweird.f32 %v1345
          %vm1421 = vweird.f32 %v1414
          %vm1422 = vmor %vm1420, %vm1421
          %v1423 = vsel %vm1422, %v1414, %v1419
          %v1424 = vrsqrt.pop %v1346
          %v1425 = vmul.f32 %v1424, %v1346
          %v1426 = vmul.f32 %v1425, %v1424
          %v1427 = vmul.f32 0.5, %v1426
          %v1428 = vsub.f32 1.5, %v1427
          %v1429 = vmul.f32 %v1424, %v1428
          %vm1430 = vweird.f32 %v1346
          %vm1431 = vweird.f32 %v1424
          %vm1432 = vmor %vm1430, %vm1431
          %v1433 = vsel %vm1432, %v1424, %v1429
          %v1434 = vrsqrt.pop %v1347
          %v1435 = vmul.f32 %v1434, %v1347
          %v1436 = vmul.f32 %v1435, %v1434
          %v1437 = vmul.f32 0.5, %v1436
          %v1438 = vsub.f32 1.5, %v1437
          %v1439 = vmul.f32 %v1434, %v1438
          %vm1440 = vweird.f32 %v1347
          %vm1441 = vweird.f32 %v1434
          %vm1442 = vmor %vm1440, %vm1441
          %v1443 = vsel %vm1442, %v1434, %v1439
          %v1444 = vrsqrt.pop %v1348
          %v1445 = vmul.f32 %v1444, %v1348
          %v1446 = vmul.f32 %v1445, %v1444
          %v1447 = vmul.f32 0.5, %v1446
          %v1448 = vsub.f32 1.5, %v1447
          %v1449 = vmul.f32 %v1444, %v1448
          %vm1450 = vweird.f32 %v1348
          %vm1451 = vweird.f32 %v1444
          %vm1452 = vmor %vm1450, %vm1451
          %v1453 = vsel %vm1452, %v1444, %v1449
          %v1454 = vrsqrt.pop %v1349
          %v1455 = vmul.f32 %v1454, %v1349
          %v1456 = vmul.f32 %v1455, %v1454
          %v1457 = vmul.f32 0.5, %v1456
          %v1458 = vsub.f32 1.5, %v1457
          %v1459 = vmul.f32 %v1454, %v1458
          %vm1460 = vweird.f32 %v1349
          %vm1461 = vweird.f32 %v1454
          %vm1462 = vmor %vm1460, %vm1461
          %v1463 = vsel %vm1462, %v1454, %v1459
          %v1464 = vrsqrt.pop %v1350
          %v1465 = vmul.f32 %v1464, %v1350
          %v1466 = vmul.f32 %v1465, %v1464
          %v1467 = vmul.f32 0.5, %v1466
          %v1468 = vsub.f32 1.5, %v1467
          %v1469 = vmul.f32 %v1464, %v1468
          %vm1470 = vweird.f32 %v1350
          %vm1471 = vweird.f32 %v1464
          %vm1472 = vmor %vm1470, %vm1471
          %v1473 = vsel %vm1472, %v1464, %v1469
          %v1474 = vrsqrt.pop %v1351
          %v1475 = vmul.f32 %v1474, %v1351
          %v1476 = vmul.f32 %v1475, %v1474
          %v1477 = vmul.f32 0.5, %v1476
          %v1478 = vsub.f32 1.5, %v1477
          %v1479 = vmul.f32 %v1474, %v1478
          %vm1480 = vweird.f32 %v1351
          %vm1481 = vweird.f32 %v1474
          %vm1482 = vmor %vm1480, %vm1481
          %v1483 = vsel %vm1482, %v1474, %v1479
          %v1484 = vrsqrt.pop %v1352
          %v1485 = vmul.f32 %v1484, %v1352
          %v1486 = vmul.f32 %v1485, %v1484
          %v1487 = vmul.f32 0.5, %v1486
          %v1488 = vsub.f32 1.5, %v1487
          %v1489 = vmul.f32 %v1484, %v1488
          %vm1490 = vweird.f32 %v1352
          %vm1491 = vweird.f32 %v1484
          %vm1492 = vmor %vm1490, %vm1491
          %v1493 = vsel %vm1492, %v1484, %v1489
          %v1494 = vrsqrt.pop %v1353
          %v1495 = vmul.f32 %v1494, %v1353
          %v1496 = vmul.f32 %v1495, %v1494
          %v1497 = vmul.f32 0.5, %v1496
          %v1498 = vsub.f32 1.5, %v1497
          %v1499 = vmul.f32 %v1494, %v1498
          %vm1500 = vweird.f32 %v1353
          %vm1501 = vweird.f32 %v1494
          %vm1502 = vmor %vm1500, %vm1501
          %v1503 = vsel %vm1502, %v1494, %v1499
          %v1504 = vrsqrt.pop %v1354
          %v1505 = vmul.f32 %v1504, %v1354
          %v1506 = vmul.f32 %v1505, %v1504
          %v1507 = vmul.f32 0.5, %v1506
          %v1508 = vsub.f32 1.5, %v1507
          %v1509 = vmul.f32 %v1504, %v1508
          %vm1510 = vweird.f32 %v1354
          %vm1511 = vweird.f32 %v1504
          %vm1512 = vmor %vm1510, %vm1511
          %v1513 = vsel %vm1512, %v1504, %v1509
          %v1514 = vrsqrt.pop %v1355
          %v1515 = vmul.f32 %v1514, %v1355
          %v1516 = vmul.f32 %v1515, %v1514
          %v1517 = vmul.f32 0.5, %v1516
          %v1518 = vsub.f32 1.5, %v1517
          %v1519 = vmul.f32 %v1514, %v1518
          %vm1520 = vweird.f32 %v1355
          %vm1521 = vweird.f32 %v1514
          %vm1522 = vmor %vm1520, %vm1521
          %v1523 = vsel %vm1522, %v1514, %v1519
          %v1524 = vrsqrt.pop %v1356
          %v1525 = vmul.f32 %v1524, %v1356
          %v1526 = vmul.f32 %v1525, %v1524
          %v1527 = vmul.f32 0.5, %v1526
          %v1528 = vsub.f32 1.5, %v1527
          %v1529 = vmul.f32 %v1524, %v1528
          %vm1530 = vweird.f32 %v1356
          %vm1531 = vweird.f32 %v1524
          %vm1532 = vmor %vm1530, %vm1531
          %v1533 = vsel %vm1532, %v1524, %v1529
          %v1534 = vrsqrt.pop %v1357
          %v1535 = vmul.f32 %v1534, %v1357
          %v1536 = vmul.f32 %v1535, %v1534
          %v1537 = vmul.f32 0.5, %v1536
          %v1538 = vsub.f32 1.5, %v1537
          %v1539 = vmul.f32 %v1534, %v1538
          %vm1540 = vweird.f32 %v1357
          %vm1541 = vweird.f32 %v1534
          %vm1542 = vmor %vm1540, %vm1541
          %v1543 = vsel %vm1542, %v1534, %v1539
          %v1544 = vrsqrt.pop %v1358
          %v1545 = vmul.f32 %v1544, %v1358
          %v1546 = vmul.f32 %v1545, %v1544
          %v1547 = vmul.f32 0.5, %v1546
          %v1548 = vsub.f32 1.5, %v1547
          %v1549 = vmul.f32 %v1544, %v1548
          %vm1550 = vweird.f32 %v1358
          %vm1551 = vweird.f32 %v1544
          %vm1552 = vmor %vm1550, %vm1551
          %v1553 = vsel %vm1552, %v1544, %v1549
          %v1554 = vrsqrt.pop %v1359
          %v1555 = vmul.f32 %v1554, %v1359
          %v1556 = vmul.f32 %v1555, %v1554
          %v1557 = vmul.f32 0.5, %v1556
          %v1558 = vsub.f32 1.5, %v1557
          %v1559 = vmul.f32 %v1554, %v1558
          %vm1560 = vweird.f32 %v1359
          %vm1561 = vweird.f32 %v1554
          %vm1562 = vmor %vm1560, %vm1561
          %v1563 = vsel %vm1562, %v1554, %v1559
          %v1564 = vrsqrt.pop %v1360
          %v1565 = vmul.f32 %v1564, %v1360
          %v1566 = vmul.f32 %v1565, %v1564
          %v1567 = vmul.f32 0.5, %v1566
          %v1568 = vsub.f32 1.5, %v1567
          %v1569 = vmul.f32 %v1564, %v1568
          %vm1570 = vweird.f32 %v1360
          %vm1571 = vweird.f32 %v1564
          %vm1572 = vmor %vm1570, %vm1571
          %v1573 = vsel %vm1572, %v1564, %v1569
          %v1574 = vrsqrt.pop %v1361
          %v1575 = vmul.f32 %v1574, %v1361
          %v1576 = vmul.f32 %v1575, %v1574
          %v1577 = vmul.f32 0.5, %v1576
          %v1578 = vsub.f32 1.5, %v1577
          %v1579 = vmul.f32 %v1574, %v1578
          %vm1580 = vweird.f32 %v1361
          %vm1581 = vweird.f32 %v1574
          %vm1582 = vmor %vm1580, %vm1581
          %v1583 = vsel %vm1582, %v1574, %v1579
          %v1584 = vrsqrt.pop %v1362
          %v1585 = vmul.f32 %v1584, %v1362
          %v1586 = vmul.f32 %v1585, %v1584
          %v1587 = vmul.f32 0.5, %v1586
          %v1588 = vsub.f32 1.5, %v1587
          %v1589 = vmul.f32 %v1584, %v1588
          %vm1590 = vweird.f32 %v1362
          %vm1591 = vweird.f32 %v1584
          %vm1592 = vmor %vm1590, %vm1591
          %v1593 = vsel %vm1592, %v1584, %v1589
          %v1594 = vrsqrt.pop %v1363
          %v1595 = vmul.f32 %v1594, %v1363
          %v1596 = vmul.f32 %v1595, %v1594
          %v1597 = vmul.f32 0.5, %v1596
          %v1598 = vsub.f32 1.5, %v1597
          %v1599 = vmul.f32 %v1594, %v1598
          %vm1600 = vweird.f32 %v1363
          %vm1601 = vweird.f32 %v1594
          %vm1602 = vmor %vm1600, %vm1601
          %v1603 = vsel %vm1602, %v1594, %v1599
          %v1604 = vmul.f32 %v1216, %v1373
          %v1605 = vmul.f32 %v1217, %v1383
          %v1606 = vmul.f32 %v1218, %v1393
          %v1607 = vmul.f32 %v1219, %v1403
          %v1608 = vmul.f32 %v1220, %v1413
          %v1609 = vmul.f32 %v1221, %v1423
          %v1610 = vmul.f32 %v1222, %v1433
          %v1611 = vmul.f32 %v1223, %v1443
          %v1612 = vmul.f32 %v1224, %v1453
          %v1613 = vmul.f32 %v1225, %v1463
          %v1614 = vmul.f32 %v1226, %v1473
          %v1615 = vmul.f32 %v1227, %v1483
          %v1616 = vmul.f32 %v1228, %v1493
          %v1617 = vmul.f32 %v1229, %v1503
          %v1618 = vmul.f32 %v1230, %v1513
          %v1619 = vmul.f32 %v1231, %v1523
          %v1620 = vmul.f32 %v1232, %v1533
          %v1621 = vmul.f32 %v1233, %v1543
          %v1622 = vmul.f32 %v1234, %v1553
          %v1623 = vmul.f32 %v1235, %v1563
          %v1624 = vmul.f32 %v1236, %v1573
          %v1625 = vmul.f32 %v1237, %v1583
          %v1626 = vmul.f32 %v1238, %v1593
          %v1627 = vmul.f32 %v1239, %v1603
          %1628 = vst [vmem:[%s154] sm:$0xff] %v1604
          %1629 = vst [vmem:[%s154 + $0x8] sm:$0xff] %v1605
          %1630 = vst [vmem:[%s154 + $0x10] sm:$0xff] %v1606
          %1631 = vst [vmem:[%s154 + $0x18] sm:$0xff] %v1607
          %1632 = vst [vmem:[%s154 + $0x20] sm:$0xff] %v1608
          %1633 = vst [vmem:[%s154 + $0x28] sm:$0xff] %v1609
          %1634 = vst [vmem:[%s154 + $0x30] sm:$0xff] %v1610
          %1635 = vst [vmem:[%s154 + $0x38] sm:$0xff] %v1611
          %1636 = vst [vmem:[%s154 + $0x40] sm:$0xff] %v1612
          %1637 = vst [vmem:[%s154 + $0x48] sm:$0xff] %v1613
          %1638 = vst [vmem:[%s154 + $0x50] sm:$0xff] %v1614
          %1639 = vst [vmem:[%s154 + $0x58] sm:$0xff] %v1615
          %1640 = vst [vmem:[%s154 + $0x60] sm:$0xff] %v1616
          %1641 = vst [vmem:[%s154 + $0x68] sm:$0xff] %v1617
          %1642 = vst [vmem:[%s154 + $0x70] sm:$0xff] %v1618
          %1643 = vst [vmem:[%s154 + $0x78] sm:$0xff] %v1619
          %1644 = vst [vmem:[%s154 + $0x80] sm:$0xff] %v1620
          %1645 = vst [vmem:[%s154 + $0x88] sm:$0xff] %v1621
          %1646 = vst [vmem:[%s154 + $0x90] sm:$0xff] %v1622
          %1647 = vst [vmem:[%s154 + $0x98] sm:$0xff] %v1623
          %1648 = vst [vmem:[%s154 + $0xa0] sm:$0xff] %v1624
          %1649 = vst [vmem:[%s154 + $0xa8] sm:$0xff] %v1625
          %1650 = vst [vmem:[%s154 + $0xb0] sm:$0xff] %v1626
          %1651 = vst [vmem:[%s154 + $0xb8] sm:$0xff] %v1627
        $region48: #{tpu_custom_call.1} parent=23 // pred_fallthru
          _
        %s1652 = sand.u32 %s70, 1
        %s1653 = scalar_lea.sflag [#allocation8], %s1652
        %s1654 = sand.u32 %s70, 1
        %s1655 = smul.addr %s1654, 192
        %s1656 = scalar_lea.vmem [#allocation9], %s1655
        // Predicated region
        $region49: #{tpu_custom_call.1} parent=23 // pred_check
          %p1657 = pneg %p80
        $region50: #{tpu_custom_call.1} parent=23 // pred_check_branch
          %1659 = sbr.rel (%p1657) target = $region52
        $region51: #{tpu_custom_call.1} parent=23 // pred_region
          %p1660 = scmp.eq.s32.totalorder %s24, 2
          %s1661 = scalar_select %p1660, %s25, 0
          %s1662 = smul.u32 24, %s1661
          %1664 = vsyncadd %s1653, 0
          %s1665 = smul.addr %s1662, 8
          %s1666 = scalar_lea.hbm %s3, %s1665
          %s1667 = sshll.u32 %s1656, 4
          %s1668 = int_to_ptr.vmem [resolvable:$true] %s1667
          %s1669 = sshll.u32 %s1666, 4
          %s1670 = int_to_ptr.hbm [resolvable:$true] %s1669
          %1675 = dma.vmem_to_hbm [thread:$0]  %s1668, 3072, %s1670, %s1653, 128, 128, 8
        $region52: #{tpu_custom_call.1} parent=23 // pred_fallthru
          _
      $region24: #{tpu_custom_call.1} parent=5 // pred_fallthru
        _
      %p1676 = scmp.le.s32.totalorder 2, %s15
      // Predicated region
      $region53: #{tpu_custom_call.1} parent=5 // pred_check
        %p1677 = pneg %p1676
      $region54: #{tpu_custom_call.1} parent=5 // pred_check_branch
        %1679 = sbr.rel (%p1677) target = $region56
      $region55: #{tpu_custom_call.1} parent=5 // pred_region
        %s1680 = ssub.s32 %s15, 2
        // Predicated region
        $region57: #{tpu_custom_call.1} parent=55 // pred_check
          %p1681 = pneg %p86
        $region58: #{tpu_custom_call.1} parent=55 // pred_check_branch
          %1683 = sbr.rel (%p1681) target = $region60
        $region59: #{tpu_custom_call.1} parent=55 // pred_region
          %s1684 = sand.u32 %s71, 1
          %s1685 = scalar_lea.sflag [#allocation8], %s1684
          %s1686 = sand.u32 %s71, 1
          %s1687 = smul.addr %s1686, 192
          %s1688 = scalar_lea.vmem [#allocation9], %s1687
          %1690 = dma.done %s1685, 3072
        $region60: #{tpu_custom_call.1} parent=55 // pred_fallthru
          _
      $region56: #{tpu_custom_call.1} parent=5 // pred_fallthru
        _
    $region6: #{tpu_custom_call.1} parent=1 // loop_footer
      %s19 = sadd.s32 1, %s15
    $region7: #{tpu_custom_call.1} parent=1 // loop_footer_branch
      %14 = sbr.rel target = $region3
    $region8: #{tpu_custom_call.1} parent=1 // loop_exit
      _
    %1691 = vsyncpa [#allocation7], 1
    %s1692 = scalar_lea.sflag [#allocation7], 1
    %1693 = vsyncpa %s1692, 1
    %1694 = vsyncpa [#allocation8], 1
    %s1695 = scalar_lea.sflag [#allocation8], 1
    %1696 = vsyncpa %s1695, 1
  %1697 = vsyncmov [#allocation5]
  %s1698 = vpop.sfrf %1697
  %p1699 = scmp.eq.s32.totalorder %s1698, 0
  %p1700 = pneg %p1699
  %1702 = shalt.err (%p1700)
  %s1703 = scalar_lea.sflag [#allocation5], 1
  %1704 = vsyncmov %s1703
  %s1705 = vpop.sfrf %1704
  %p1706 = scmp.eq.s32.totalorder %s1705, 0
  %p1707 = pneg %p1706
  %1709 = shalt.err (%p1707)

</llo_original>
